<compile_context>
chip_gen: v7x
topology: tpu7x:2x2x1
jax: 0.10.0
libtpu: 0.0.40
codegen_flags: <defaults>
</compile_context>

<pallas_src>
import numpy as np
import jax
import jax.numpy as jnp
from jax.experimental import pallas as pl
from jax.experimental.pallas import tpu as pltpu

# ----------------------------- configuration --------------------------------
NJ = 7            # robot joints (N_STATE)
B = 1             # forward() is always called with one configuration (unsqueeze(0))
L = 4             # links in the skeleton (len(link_skeleton))
C = 70            # control_points_number
N_PCD = 5000      # obstacle point cloud size (module uses 100k; shrunk for demo,
                  # deliberately NOT a multiple of the tile to exercise padding)
NT = 500          # trajectory waypoints (update_trajectory interpolates to 500)
COLLISION_THRESHOLD = 0.01

CP = B * C
CP_PAD = 72       # next multiple of 8 >= 70
TN = 2048         # point-cloud lane tile (acc scratch = (72, 2048) f32 ~ 0.6 MB)
NCHUNK = 2        # leading 'parallel' grid axis (second TC on v7x; no-op elsewhere)


# ----------------------- kernel: SDF (min squared distance) -----------------
def _sdf_min_kernel(cp_ref, pcd_ref, out_ref, acc_ref):
    """Running min of squared distances from each control point to a pcd lane tile."""
    k = pl.program_id(1)

    @pl.when(k == 0)
    def _():
        acc_ref[...] = jnp.full((CP_PAD, TN), 1e30, dtype=jnp.float32)

    d2 = jnp.zeros((CP_PAD, TN), dtype=jnp.float32)
    for j in range(3):  # xyz
        a = jnp.broadcast_to(cp_ref[:, j:j + 1], (CP_PAD, TN))   # lane broadcast
        b = jnp.broadcast_to(pcd_ref[j:j + 1, :], (CP_PAD, TN))  # sublane broadcast
        diff = a - b
        d2 = d2 + diff * diff
    acc_ref[...] = jnp.minimum(acc_ref[...], d2)

    @pl.when(k == pl.num_programs(1) - 1)
    def _():
        # keep squared distances; the single sqrt is done in JAX after the final min
        out_ref[0] = jnp.min(acc_ref[...], axis=1, keepdims=True)


def min_sq_distance_to_pcd(cp_pad, pcd_t_pad):
    """cp_pad: (CP_PAD, 3); pcd_t_pad: (3, N_PCD_PAD) -> (CP_PAD, 1) min squared dist."""
    n_pad = pcd_t_pad.shape[1]
    assert n_pad % (NCHUNK * TN) == 0
    tiles_per_chunk = n_pad // (NCHUNK * TN)

    partial = pl.pallas_call(
        _sdf_min_kernel,
        out_shape=jax.ShapeDtypeStruct((NCHUNK, CP_PAD, 1), jnp.float32),
        grid_spec=pltpu.PrefetchScalarGridSpec(
            num_scalar_prefetch=0,
            grid=(NCHUNK, tiles_per_chunk),
            in_specs=[
                pl.BlockSpec((CP_PAD, 3), lambda p, k: (0, 0)),
                pl.BlockSpec((3, TN), lambda p, k: (0, p * tiles_per_chunk + k)),
            ],
            out_specs=pl.BlockSpec((1, CP_PAD, 1), lambda p, k: (p, 0, 0)),
            scratch_shapes=[pltpu.VMEM((CP_PAD, TN), jnp.float32)],
        ),
        compiler_params=pltpu.CompilerParams(
            dimension_semantics=("parallel", "arbitrary")),
    )(cp_pad, pcd_t_pad)
    # combine the per-chunk partial mins
    return jnp.min(partial, axis=0)                                # (CP_PAD, 1)


def pad_pointcloud(pcd):
    """(N, 3) -> (3, N_PAD) transposed + padded with far-away sentinel points so the
    tail tile never wins the min (handles N not divisible by NCHUNK*TN)."""
    n = pcd.shape[0]
    n_pad = int(np.ceil(n / (NCHUNK * TN))) * NCHUNK * TN
    out = jnp.full((3, n_pad), 1e6, dtype=jnp.float32)
    return out.at[:, :n].set(pcd.T.astype(jnp.float32))


# ------------------------------- JAX glue ------------------------------------
def linear_interp_matrix(n_in, n_out):
    """Weight matrix for F.interpolate(mode='linear', align_corners=True)."""
    W = np.zeros((n_out, n_in), dtype=np.float32)
    for i in range(n_out):
        src = i * (n_in - 1) / (n_out - 1) if n_out > 1 else 0.0
        i0 = min(int(np.floor(src)), n_in - 2)
        frac = src - i0
        W[i, i0] += 1.0 - frac
        W[i, i0 + 1] += frac
    return jnp.asarray(W)


def synth_fk_skeleton(states, fk_A, fk_c):
    # TODO(synk): URDF-based pytorch_kinematics forward kinematics has no Pallas/JAX
    # equivalent without the URDF file; replaced by a deterministic synthetic FK.
    feats = jnp.concatenate([jnp.sin(states), jnp.cos(states)], axis=-1)   # (M, 2*NJ)
    return jnp.einsum('mf,lfd->mld', feats, fk_A) + fk_c                   # (M, L, 3)


def synth_ee_pose(state, fk_A, fk_c, world_to_robot_base):
    skel = synth_fk_skeleton(state, fk_A, fk_c)
    ee = jnp.eye(4, dtype=jnp.float32).at[:3, 3].set(skel[0, -1])
    return world_to_robot_base @ ee


def valid_waypoint_goal(trajectory, traj_skel, skel_cp, current_ja, sdf_value):
    """attractive_potential goal selection (consider_obstacle_collisions branch).
    Tiny (500 x 4 norms) -> plain JAX, not worth a second pallas_call."""
    diff = traj_skel - skel_cp                                   # (NT, L, 3)
    dn = jnp.linalg.norm(diff, axis=2)                           # (NT, L)
    valid = jnp.all(dn <= sdf_value + 0.05, axis=1)              # (NT,)
    any_valid = jnp.any(valid)
    last_idx = NT - 1 - jnp.argmax(valid[::-1])
    return jnp.where(any_valid, trajectory[last_idx], current_ja[0])


def forward(params, current_ja):
    """Mirrors TrajectoryFollower.forward (no control_points_json path)."""
    # _get_control_points: skeleton FK + linear interpolate to 70 control points
    skel_cp = synth_fk_skeleton(current_ja, params['fk_A'], params['fk_c'])     # (B, L, 3)
    control_points = jnp.einsum('cl,bld->bcd', params['W_interp_cp'], skel_cp)  # (B, C, 3)

    # compute_ee_pose (value is unused downstream; mirrored for fidelity)
    _eef_m = synth_ee_pose(current_ja, params['fk_A'], params['fk_c'],
                           params['world_to_robot_base'])

    # implicit_obstacles: csdf.forward(control_points) - collision_threshold
    # TODO(synk): PointCloud_CSDF internals are unavailable; modelled as nearest-point
    # distance of the control points to the obstacle point cloud (min over points+cps).
    cp_flat = control_points.reshape(B * C, 3)
    cp_pad = jnp.zeros((CP_PAD, 3), jnp.float32).at[:CP].set(cp_flat)
    per_cp_d2 = min_sq_distance_to_pcd(cp_pad, params['pcd_t_pad'])             # (CP_PAD, 1)
    min_d2 = jnp.min(per_cp_d2[:CP, 0].reshape(B, C), axis=1)                   # (B,)
    csdf_values = jnp.sqrt(jnp.maximum(min_d2, 0.0))
    sdf_value = csdf_values - COLLISION_THRESHOLD
    repulsive_potential = sdf_value

    # attractive_potential (consider_obstacle_collisions == True branch)
    goal = valid_waypoint_goal(params['trajectory'], params['traj_skel'],
                               skel_cp, current_ja, sdf_value)                  # (NJ,)
    dist = jnp.linalg.norm(current_ja - goal, axis=-1)                          # (B,)
    attractive_potential = dist ** 2

    potential = (1.0 + 10.0 * attractive_potential) / (1.0 + 2.0 * repulsive_potential)
    return potential


def reference_forward(params, current_ja):
    """Pure-jnp reference mirroring the torch forward (for a sanity check)."""
    skel_cp = synth_fk_skeleton(current_ja, params['fk_A'], params['fk_c'])
    control_points = jnp.einsum('cl,bld->bcd', params['W_interp_cp'], skel_cp)
    d = jnp.linalg.norm(control_points[:, :, None, :] -
                        params['pcd'][None, None, :, :], axis=-1)               # (B,C,N)
    sdf_value = jnp.min(d, axis=(1, 2)) - COLLISION_THRESHOLD
    diff = params['traj_skel'] - skel_cp                                        # (NT,L,3)
    dn = jnp.linalg.norm(diff, axis=2)                                          # (NT,L)
    valid = jnp.all(dn <= sdf_value + 0.05, axis=1)
    any_valid = jnp.any(valid)
    last_idx = NT - 1 - jnp.argmax(valid[::-1])
    goal = jnp.where(any_valid, params['trajectory'][last_idx], current_ja[0])
    attractive = jnp.linalg.norm(current_ja - goal, axis=-1) ** 2
    return (1.0 + 10.0 * attractive) / (1.0 + 2.0 * sdf_value)


# --------------------------------- main --------------------------------------
if __name__ == "__main__":
    key = jax.random.PRNGKey(0)
    k1, k2, k3, k4 = jax.random.split(key, 4)

    # synthetic FK parameters (deterministic)
    fk_A = 0.3 * jax.random.normal(k1, (L, 2 * NJ, 3), dtype=jnp.float32)
    fk_c = jnp.stack([jnp.array([0.0, 0.0, 0.1 * (l + 1)], jnp.float32) for l in range(L)])

    # obstacle point cloud (csdf point cloud); transposed + padded for the kernel
    pcd = 0.8 * jax.random.normal(k2, (N_PCD, 3), dtype=jnp.float32) + \
        jnp.array([0.8, 0.0, 0.4], jnp.float32)
    pcd_t_pad = pad_pointcloud(pcd)                                             # (3, N_PCD_PAD)

    # trajectory: raw 8 waypoints -> interpolate(size=500) as in update_trajectory
    traj_raw = 0.5 * jax.random.normal(k3, (8, NJ), dtype=jnp.float32)
    trajectory = linear_interp_matrix(8, NT) @ traj_raw                         # (NT, NJ)
    traj_skel = synth_fk_skeleton(trajectory, fk_A, fk_c)                       # (NT, L, 3)

    params = dict(
        fk_A=fk_A,
        fk_c=fk_c,
        pcd=pcd,
        pcd_t_pad=pcd_t_pad,
        trajectory=trajectory,
        traj_skel=traj_skel,
        W_interp_cp=linear_interp_matrix(L, C),
        world_to_robot_base=jnp.eye(4, dtype=jnp.float32).at[:3, 3].set(
            jnp.array([0.0, 0.0, 0.1], jnp.float32)),
    )

    current_ja = 0.3 * jax.random.normal(k4, (B, NJ), dtype=jnp.float32)

    potential = jax.jit(forward)(params, current_ja)
    potential = jax.block_until_ready(potential)

    ref = jax.block_until_ready(reference_forward(params, current_ja))
    assert potential.shape == (B,)
    assert np.allclose(np.asarray(potential), np.asarray(ref), rtol=1e-3, atol=1e-3), \
        (potential, ref)

    print("KERNEL_OK")
</pallas_src>

<mosaic_0001>
module attributes {stable_mosaic.version = 11 : i64} {
  func.func @_sdf_min_kernel(%arg0: i32, %arg1: i32, %arg2: memref<72x3xf32, #tpu.memory_space<vmem>>, %arg3: memref<3x2048xf32, #tpu.memory_space<vmem>>, %arg4: memref<1x72x1xf32, #tpu.memory_space<vmem>>, %arg5: memref<72x2048xf32, #tpu.memory_space<vmem>>) attributes {dimension_semantics = [#tpu.dimension_semantics<parallel>, #tpu.dimension_semantics<arbitrary>], iteration_bounds = array<i64: 2, 2>, scalar_prefetch = 0 : i64, scratch_operands = 1 : i64, tpu.core_type = #tpu.core_type<tc>, window_params = [{pipeline_mode = #tpu.pipeline_mode<synchronous>, transform_indices = @transform_0, window_bounds = array<i64: 72, 3>}, {transform_indices = @transform_1, window_bounds = array<i64: 3, 2048>}, {transform_indices = @transform_2, window_bounds = array<i64: 1, 72, 1>}]} {
    %c0_i32 = arith.constant 0 : i32
    %0 = arith.cmpi eq, %arg1, %c0_i32 : i32
    %1 = arith.extui %0 : i1 to i32
    %c0_i32_0 = arith.constant 0 : i32
    %2 = arith.cmpi ne, %1, %c0_i32_0 : i32
    scf.if %2 {
      %cst_15 = arith.constant 1.000000e+30 : f32
      %37 = vector.broadcast %cst_15 : f32 to vector<72x2048xf32>
      %c0_16 = arith.constant 0 : index
      %c0_17 = arith.constant 0 : index
      %38 = vector.load %arg5[%c0_16, %c0_17] : memref<72x2048xf32, #tpu.memory_space<vmem>>, vector<72x2048xf32>
      tpu.vector_store %arg5[%c0_16, %c0_17], %37 {strides = array<i32>} : memref<72x2048xf32, #tpu.memory_space<vmem>>, vector<72x2048xf32>,
    } else {
    }
    %cst = arith.constant 0.000000e+00 : f32
    %3 = vector.broadcast %cst : f32 to vector<72x2048xf32>
    %c0 = arith.constant 0 : index
    %c0_1 = arith.constant 0 : index
    %4 = vector.load %arg2[%c0, %c0_1] : memref<72x3xf32, #tpu.memory_space<vmem>>, vector<72x1xf32>
    %5 = vector.shape_cast %4 : vector<72x1xf32> to vector<72x1xf32>
    %6 = vector.broadcast %5 : vector<72x1xf32> to vector<72x2048xf32>
    %c0_2 = arith.constant 0 : index
    %c0_3 = arith.constant 0 : index
    %7 = vector.load %arg3[%c0_2, %c0_3] : memref<3x2048xf32, #tpu.memory_space<vmem>>, vector<1x2048xf32>
    %8 = vector.shape_cast %7 : vector<1x2048xf32> to vector<1x2048xf32>
    %9 = vector.broadcast %8 : vector<1x2048xf32> to vector<72x2048xf32>
    %10 = arith.subf %6, %9 : vector<72x2048xf32>
    %11 = arith.mulf %10, %10 : vector<72x2048xf32>
    %12 = arith.addf %3, %11 : vector<72x2048xf32>
    %c0_4 = arith.constant 0 : index
    %c1 = arith.constant 1 : index
    %13 = vector.load %arg2[%c0_4, %c1] : memref<72x3xf32, #tpu.memory_space<vmem>>, vector<72x1xf32>
    %14 = vector.shape_cast %13 : vector<72x1xf32> to vector<72x1xf32>
    %15 = vector.broadcast %14 : vector<72x1xf32> to vector<72x2048xf32>
    %c1_5 = arith.constant 1 : index
    %c0_6 = arith.constant 0 : index
    %16 = vector.load %arg3[%c1_5, %c0_6] : memref<3x2048xf32, #tpu.memory_space<vmem>>, vector<1x2048xf32>
    %17 = vector.shape_cast %16 : vector<1x2048xf32> to vector<1x2048xf32>
    %18 = vector.broadcast %17 : vector<1x2048xf32> to vector<72x2048xf32>
    %19 = arith.subf %15, %18 : vector<72x2048xf32>
    %20 = arith.mulf %19, %19 : vector<72x2048xf32>
    %21 = arith.addf %12, %20 : vector<72x2048xf32>
    %c0_7 = arith.constant 0 : index
    %c2 = arith.constant 2 : index
    %22 = vector.load %arg2[%c0_7, %c2] : memref<72x3xf32, #tpu.memory_space<vmem>>, vector<72x1xf32>
    %23 = vector.shape_cast %22 : vector<72x1xf32> to vector<72x1xf32>
    %24 = vector.broadcast %23 : vector<72x1xf32> to vector<72x2048xf32>
    %c2_8 = arith.constant 2 : index
    %c0_9 = arith.constant 0 : index
    %25 = vector.load %arg3[%c2_8, %c0_9] : memref<3x2048xf32, #tpu.memory_space<vmem>>, vector<1x2048xf32>
    %26 = vector.shape_cast %25 : vector<1x2048xf32> to vector<1x2048xf32>
    %27 = vector.broadcast %26 : vector<1x2048xf32> to vector<72x2048xf32>
    %28 = arith.subf %24, %27 : vector<72x2048xf32>
    %29 = arith.mulf %28, %28 : vector<72x2048xf32>
    %30 = arith.addf %21, %29 : vector<72x2048xf32>
    %c0_10 = arith.constant 0 : index
    %c0_11 = arith.constant 0 : index
    %31 = vector.load %arg5[%c0_10, %c0_11] : memref<72x2048xf32, #tpu.memory_space<vmem>>, vector<72x2048xf32>
    %32 = arith.minimumf %31, %30 : vector<72x2048xf32>
    %c0_12 = arith.constant 0 : index
    %c0_13 = arith.constant 0 : index
    %33 = vector.load %arg5[%c0_12, %c0_13] : memref<72x2048xf32, #tpu.memory_space<vmem>>, vector<72x2048xf32>
    tpu.vector_store %arg5[%c0_12, %c0_13], %32 {strides = array<i32>} : memref<72x2048xf32, #tpu.memory_space<vmem>>, vector<72x2048xf32>,
    %c1_i32 = arith.constant 1 : i32
    %34 = arith.cmpi eq, %arg1, %c1_i32 : i32
    %35 = arith.extui %34 : i1 to i32
    %c0_i32_14 = arith.constant 0 : i32
    %36 = arith.cmpi ne, %35, %c0_i32_14 : i32
    scf.if %36 {
      %c0_15 = arith.constant 0 : index
      %c0_16 = arith.constant 0 : index
      %37 = vector.load %arg5[%c0_15, %c0_16] : memref<72x2048xf32, #tpu.memory_space<vmem>>, vector<72x2048xf32>
      %cst_17 = arith.constant dense<0x7F800000> : vector<72xf32>
      %38 = vector.multi_reduction <minimumf>, %37, %cst_17 [1] : vector<72x2048xf32> to vector<72xf32>
      %39 = vector.shape_cast %38 : vector<72xf32> to vector<72x1xf32>
      %c0_18 = arith.constant 0 : index
      %c0_19 = arith.constant 0 : index
      %c0_20 = arith.constant 0 : index
      %40 = vector.load %arg4[%c0_18, %c0_19, %c0_20] : memref<1x72x1xf32, #tpu.memory_space<vmem>>, vector<1x72x1xf32>
      %41 = vector.shape_cast %40 : vector<1x72x1xf32> to vector<72x1xf32>
      %42 = vector.shape_cast %39 : vector<72x1xf32> to vector<1x72x1xf32>
      tpu.vector_store %arg4[%c0_18, %c0_19, %c0_20], %42 {strides = array<i32>} : memref<1x72x1xf32, #tpu.memory_space<vmem>>, vector<1x72x1xf32>,
    } else {
    }
    return
  }
  func.func @transform_0(%arg0: i32, %arg1: i32) -> (i32, i32) {
    %c0_i32 = arith.constant 0 : i32
    %c0_i32_0 = arith.constant 0 : i32
    %c0_i32_1 = arith.constant 0 : i32
    return %c0_i32, %c0_i32_0 : i32, i32
  }
  func.func @transform_1(%arg0: i32, %arg1: i32) -> (i32, i32) {
    %c2_i32 = arith.constant 2 : i32
    %0 = arith.muli %arg0, %c2_i32 : i32
    %1 = arith.addi %0, %arg1 : i32
    %c0_i32 = arith.constant 0 : i32
    %c0_i32_0 = arith.constant 0 : i32
    return %c0_i32, %1 : i32, i32
  }
  func.func @transform_2(%arg0: i32, %arg1: i32) -> (i32, i32, i32) {
    %c0_i32 = arith.constant 0 : i32
    %c0_i32_0 = arith.constant 0 : i32
    %c0_i32_1 = arith.constant 0 : i32
    return %arg0, %c0_i32, %c0_i32_0 : i32, i32, i32
  }
}

</mosaic_0001>

<llo_original>
// kernel: reverse
$region0: #{reverse}
  %s0 = inlined_call_operand.vmem [shape: pred[512], index: 0, kind: input, shape index: {}]
  %s1 = inlined_call_operand.vmem [shape: pred[512], index: 1, kind: output, shape index: {}]
  %v2 = vlaneseq
  %v3 = vsub.s32 127, %v2
  %4 = vset.pattern.permute.xlu0 %v3
  $region1: #{reverse} parent=0
    #allocation0 [shape = 'u8[8192]{0}', space=vmem, size = 0x2000, scoped, tag = 'operand span for operand 0']
    #allocation1 [shape = 'u8[1024]{0}', space=vmem, size = 0x400, scoped, tag = 'packed  for operand 0']
    #allocation2 [shape = 'u8[4096]{0}', space=vmem, size = 0x1000, scoped, tag = 'operand span for operand 1']
    #allocation3 [shape = 'u8[512]{0}', space=vmem, size = 0x400, scoped, tag = 'packed  for operand 1']
    %s5 = scalar_lea.vmem [#allocation1], 1
    // Predicated region
    $region2: #{reverse} parent=1 // pred_check
      _
    $region3: #{reverse} parent=1 // pred_check_branch
      %7 = sbr.rel (0) target = $region5
    $region4: #{reverse} parent=1 // pred_region
      // Predicated region
      $region6: #{reverse} parent=4 // pred_check
        _
      $region7: #{reverse} parent=4 // pred_check_branch
        %9 = sbr.rel target = $region9
      $region8: #{reverse} parent=4 // pred_region
        // Predicated region
        $region21: #{reverse} parent=8 // pred_check
          _
        $region22: #{reverse} parent=8 // pred_check_branch
          %24 = sbr.rel (0) target = $region24
        $region23: #{reverse} parent=8 // pred_region
          loop: start=0, step=1, limit=1
          $region25: #{reverse} parent=23 // loop_pre_header
            _
          $region26: #{reverse} parent=23 // loop_header
            %s27 = sphi 0, %s31
            %p28 = scmp.ge.s32.totalorder %s27, 1
            %s32 = sphi %s0, %s0
            %s33 = sphi %s5, %s5
          $region27: #{reverse} parent=23 // loop_header_branch
            %30 = sbr.rel (%p28) target = $region31
          $region28: #{reverse} parent=23 // loop_body
            %v34 = vld [vmem:[%s32] sm:$0x1]
            %35 = vst [vmem:[%s33] sm:$0x1] %v34
          $region29: #{reverse} parent=23 // loop_footer
            %s31 = sadd.s32 1, %s27
          $region30: #{reverse} parent=23 // loop_footer_branch
            %26 = sbr.rel target = $region26
          $region31: #{reverse} parent=23 // loop_exit
            _
        $region24: #{reverse} parent=8 // pred_fallthru
          _
      $region9: #{reverse} parent=4 // pred_fallthru
        _
      // Predicated region
      $region10: #{reverse} parent=4 // pred_check
        _
      $region11: #{reverse} parent=4 // pred_check_branch
        %11 = sbr.rel (0) target = $region13
      $region12: #{reverse} parent=4 // pred_region
        loop: start=0, step=1, limit=1
        $region14: #{reverse} parent=12 // loop_pre_header
          _
        $region15: #{reverse} parent=12 // loop_header
          %s14 = sphi 0, %s18
          %p15 = scmp.ge.s32.totalorder %s14, 1
          %s19 = sphi %s0, %s0
          %s20 = sphi %s5, %s5
        $region16: #{reverse} parent=12 // loop_header_branch
          %17 = sbr.rel (%p15) target = $region20
        $region17: #{reverse} parent=12 // loop_body
          %v21 = vld [vmem:[%s19] sm:$0x1]
          %22 = vst [vmem:[%s20] sm:$0x1] %v21
        $region18: #{reverse} parent=12 // loop_footer
          %s18 = sadd.s32 1, %s14
        $region19: #{reverse} parent=12 // loop_footer_branch
          %13 = sbr.rel target = $region15
        $region20: #{reverse} parent=12 // loop_exit
          _
      $region13: #{reverse} parent=4 // pred_fallthru
        _
    $region5: #{reverse} parent=1 // pred_fallthru
      _
    %36 = vnop
    %s38 = smul.u32 1, 4
    %s39 = sshllo.u32 0, %s38
    %s40 = sand.u32 %s39, 15
    %p41 = scmp.ne.s32.totalorder %s40, 0
    %s42 = scalar_select %p41, 1, 0
    %s43 = sand.u32 %s39, 240
    %p44 = scmp.ne.s32.totalorder %s43, 0
    %s45 = scalar_select %p44, 2, 0
    %s46 = sor.u32 %s42, %s45
    %s47 = scalar_lea.vmem [#allocation1], 1
    %v48 = vld [vmem:[%s47] sm:%s46]
    %v49 = vunpack.c.0.s8 %v48
    %v50 = vunpack.c.1.s8 %v48
    %v51 = vunpack.c.2.s8 %v48
    %v52 = vunpack.c.3.s8 %v48
    %s53 = scalar_lea.vmem [#allocation0], 8
    %54 = vst [vmem:[%s53] sm:%s39] %v49
    %s55 = sand.u32 %s39, 15
    %p56 = scmp.ne.s32.totalorder %s55, 0
    %s57 = scalar_select %p56, 1, 0
    %s58 = sand.u32 %s39, 240
    %p59 = scmp.ne.s32.totalorder %s58, 0
    %s60 = scalar_select %p59, 2, 0
    %s61 = sor.u32 %s57, %s60
    %v62 = vld [vmem:[#allocation1] sm:%s61]
    %v63 = vunpack.c.0.s8 %v62
    %v64 = vunpack.c.1.s8 %v62
    %v65 = vunpack.c.2.s8 %v62
    %v66 = vunpack.c.3.s8 %v62
    %67 = vst [vmem:[#allocation0] sm:%s39] %v63
    %s68 = scalar_lea.vmem [#allocation0], 7
    %v69 = vld [vmem:[%s68] ss:$-1 sm:$0xff]
    %v70 = vrot.slane %v69, 4
    %71 = vperm.xlu0 %4, %v70
    %v72 = vpop.permute.xlu0 %71
    %73 = vst [vmem:[#allocation2] sm:$0xff] %v72
    %s74 = scalar_lea.vmem [#allocation0], 8
    %s75 = scalar_lea.vmem %s74, 7 [#allocation0]
    %v76 = vld [vmem:[%s75] ss:$-1 sm:$0xff]
    %v77 = vrot.slane %v76, 4
    %78 = vperm.xlu0 %4, %v77
    %v79 = vpop.permute.xlu0 %78
    %v80 = vlaneseq
    %v81 = vshrl.u32 %v80, 7
    %vm82 = vcmp.lt.s32.totalorder %v81, 4
    %83 = vst.msk [vmem:[#allocation2] sm:$0xff] %vm82, %v79
    %s85 = smul.u32 1, 4
    %s86 = sshllo.u32 0, %s85
    %s87 = sshrl.u32 %s85, 2
    %v88 = vld [vmem:[#allocation2] sm:%s86]
    %s89 = sshllo.u32 0, %s87
    %v90 = vpack.c.b16 0, %v88
    %v91 = vpack.c.b8 0, %v90
    %92 = vst [vmem:[#allocation3] sm:%s89] %v91
    // Predicated region
    $region32: #{reverse} parent=1 // pred_check
      _
    $region33: #{reverse} parent=1 // pred_check_branch
      %94 = sbr.rel (0) target = $region35
    $region34: #{reverse} parent=1 // pred_region
      // Predicated region
      $region36: #{reverse} parent=34 // pred_check
        _
      $region37: #{reverse} parent=34 // pred_check_branch
        %96 = sbr.rel target = $region39
      $region38: #{reverse} parent=34 // pred_region
        // Predicated region
        $region51: #{reverse} parent=38 // pred_check
          _
        $region52: #{reverse} parent=38 // pred_check_branch
          %111 = sbr.rel (0) target = $region54
        $region53: #{reverse} parent=38 // pred_region
          loop: start=0, step=1, limit=1
          $region55: #{reverse} parent=53 // loop_pre_header
            _
          $region56: #{reverse} parent=53 // loop_header
            %s114 = sphi 0, %s118
            %p115 = scmp.ge.s32.totalorder %s114, 1
            %s119 = sphi [#allocation3], [#allocation3]
            %s120 = sphi %s1, %s1
          $region57: #{reverse} parent=53 // loop_header_branch
            %117 = sbr.rel (%p115) target = $region61
          $region58: #{reverse} parent=53 // loop_body
            %v121 = vld [vmem:[%s119] sm:$0x1]
            %122 = vst [vmem:[%s120] sm:$0x1] %v121
          $region59: #{reverse} parent=53 // loop_footer
            %s118 = sadd.s32 1, %s114
          $region60: #{reverse} parent=53 // loop_footer_branch
            %113 = sbr.rel target = $region56
          $region61: #{reverse} parent=53 // loop_exit
            _
        $region54: #{reverse} parent=38 // pred_fallthru
          _
      $region39: #{reverse} parent=34 // pred_fallthru
        _
      // Predicated region
      $region40: #{reverse} parent=34 // pred_check
        _
      $region41: #{reverse} parent=34 // pred_check_branch
        %98 = sbr.rel (0) target = $region43
      $region42: #{reverse} parent=34 // pred_region
        loop: start=0, step=1, limit=1
        $region44: #{reverse} parent=42 // loop_pre_header
          _
        $region45: #{reverse} parent=42 // loop_header
          %s101 = sphi 0, %s105
          %p102 = scmp.ge.s32.totalorder %s101, 1
          %s106 = sphi [#allocation3], [#allocation3]
          %s107 = sphi %s1, %s1
        $region46: #{reverse} parent=42 // loop_header_branch
          %104 = sbr.rel (%p102) target = $region50
        $region47: #{reverse} parent=42 // loop_body
          %v108 = vld [vmem:[%s106] sm:$0x1]
          %109 = vst [vmem:[%s107] sm:$0x1] %v108
        $region48: #{reverse} parent=42 // loop_footer
          %s105 = sadd.s32 1, %s101
        $region49: #{reverse} parent=42 // loop_footer_branch
          %100 = sbr.rel target = $region45
        $region50: #{reverse} parent=42 // loop_exit
          _
      $region43: #{reverse} parent=34 // pred_fallthru
        _
    $region35: #{reverse} parent=1 // pred_fallthru
      _
    %123 = vnop

// kernel: forward.1
$region0: #{forward.1}
  #allocation0 [shape = 'u32[]', space=smem, size = 0x4, offset = 0x4, fixed_abs, tag = 'smem constant byte address 0x4 - core index']
  #allocation1 [shape = 'u32[144,128]{1,0:T(1,128)}', space=vmem, size = 0x12000, scoped, tag = 'internal scratch']
  #allocation2 [shape = 'f32[72,2048]{1,0:T(8,128)}', space=vmem, size = 0x90000, scoped, tag = 'scratch operand']
  %s0 = inlined_call_operand.vmem [shape: f32[72,3], index: 0, kind: input, shape index: {}]
  %s1 = inlined_call_operand.vmem [shape: f32[3,8192], index: 1, kind: input, shape index: {}]
  %s2 = inlined_call_operand.vmem [shape: f32[2,72,1], index: 2, kind: output, shape index: {}]
  %s3 = sld [smem:[#allocation0]]
  $region49: #{forward.1} parent=0
    _
  %s5 = ssub.s32 1, %s3
  %s6 = scalar_select 0, %s5, %s3
  loop: start=0, step=1, limit=6
  $region2: #{forward.1} parent=0 // loop_pre_header
    _
  $region3: #{forward.1} parent=0 // loop_header
    %s8 = sphi 0, %s12
    %p9 = scmp.ge.s32.totalorder %s8, 6
    %s15 = sphi 0, %s27
    %s16 = sphi 0, %s23
    %s17 = sphi 0, %s15
    %s18 = sphi 0, %s16
    %s19 = sphi 0, %s17
    %s20 = sphi 0, %s18
    %s28 = sphi 0, %s28
    %s30 = sphi 0, %s28
    %s31 = sphi 0, %s30
    %s45 = sphi 0, %s31
    %s55 = sphi 0, %s57
    %s58 = sphi 0, %s55
    %s59 = sphi 0, %s58
    %s75 = sphi 0, %s59
    %s81 = sphi 0, %s83
    %s84 = sphi 0, %s81
    %s85 = sphi 0, %s84
    %s101 = sphi 0, %s85
  $region4: #{forward.1} parent=0 // loop_header_branch
    %11 = sbr.rel (%p9) target = $region8
  $region5: #{forward.1} parent=0 // loop_body
    %s13 = ssub.s32 %s8, 1
    %s14 = ssub.s32 %s8, 2
    %s21 = sadd.s32 1, %s16
    %p22 = scmp.ge.s32.totalorder %s21, 2
    %s23 = scalar_select %p22, 0, %s21
    %s24 = sadd.s32 1, %s15
    %s25 = scalar_select %p22, %s24, %s15
    %p26 = scmp.ge.s32.totalorder %s25, 2
    %s27 = scalar_select %p26, 0, %s25
    %s29 = sadd.s32 %s28, 1
    %p32 = scmp.eq.s32.totalorder %s8, 3
    %p33 = scmp.ne.s32.totalorder %s28, %s30
    %p34 = scmp.eq.s32.totalorder %s8, 0
    %p35 = por %p33, %p34
    %p36 = scmp.ne.s32.totalorder %s28, %s30
    %p37 = scmp.eq.s32.totalorder %s13, 3
    %p38 = por %p36, %p37
    %p39 = scmp.ne.s32.totalorder %s30, %s31
    %p40 = scmp.eq.s32.totalorder %s13, 0
    %p41 = por %p39, %p40
    %p42 = scmp.ne.s32.totalorder %s30, %s31
    %p43 = scmp.eq.s32.totalorder %s14, 3
    %p44 = por %p42, %p43
    %p46 = scmp.ne.s32.totalorder %s31, %s45
    %p47 = scmp.eq.s32.totalorder %s14, 0
    %p48 = por %p46, %p47
    %s49 = smul.u32 %s15, 2
    %s50 = sadd.s32 %s49, %s16
    %s51 = smul.u32 %s27, 2
    %s52 = sadd.s32 %s51, %s23
    %s53 = ssub.s32 %s50, %s52
    %p54 = scmp.eq.s32.totalorder %s53, 0
    %s56 = sadd.s32 %s55, 1
    %s57 = scalar_select %p54, %s55, %s56
    %p60 = pneg %p54
    %p61 = scmp.eq.s32.totalorder %s8, 3
    %p62 = por %p60, %p61
    %p63 = scmp.ne.s32.totalorder %s55, %s58
    %p64 = scmp.eq.s32.totalorder %s8, 0
    %p65 = por %p63, %p64
    %p66 = scmp.ne.s32.totalorder %s55, %s58
    %p67 = scmp.eq.s32.totalorder %s13, 3
    %p68 = por %p66, %p67
    %p69 = scmp.ne.s32.totalorder %s58, %s59
    %p70 = scmp.eq.s32.totalorder %s13, 0
    %p71 = por %p69, %p70
    %p72 = scmp.ne.s32.totalorder %s58, %s59
    %p73 = scmp.eq.s32.totalorder %s14, 3
    %p74 = por %p72, %p73
    %p76 = scmp.ne.s32.totalorder %s59, %s75
    %p77 = scmp.eq.s32.totalorder %s14, 0
    %p78 = por %p76, %p77
    %s79 = ssub.s32 %s15, %s27
    %p80 = scmp.eq.s32.totalorder %s79, 0
    %s82 = sadd.s32 %s81, 1
    %s83 = scalar_select %p80, %s81, %s82
    %p86 = pneg %p80
    %p87 = scmp.eq.s32.totalorder %s8, 3
    %p88 = por %p86, %p87
    %p89 = scmp.ne.s32.totalorder %s81, %s84
    %p90 = scmp.eq.s32.totalorder %s8, 0
    %p91 = por %p89, %p90
    %p92 = scmp.ne.s32.totalorder %s81, %s84
    %p93 = scmp.eq.s32.totalorder %s13, 3
    %p94 = por %p92, %p93
    %p95 = scmp.ne.s32.totalorder %s84, %s85
    %p96 = scmp.eq.s32.totalorder %s13, 0
    %p97 = por %p95, %p96
    %p98 = scmp.ne.s32.totalorder %s84, %s85
    %p99 = scmp.eq.s32.totalorder %s14, 3
    %p100 = por %p98, %p99
    %p102 = scmp.ne.s32.totalorder %s85, %s101
    %p103 = scmp.eq.s32.totalorder %s14, 0
    %p104 = por %p102, %p103
    %p105 = scmp.le.s32.totalorder 1, %s8
    %p106 = scmp.lt.s32.totalorder %s8, 5
    %p107 = pnand %p105, %p106
    %p108 = pneg %p107
    // Predicated region
    $region9: #{forward.1} parent=5 // pred_check
      _
    $region10: #{forward.1} parent=5 // pred_check_branch
      %110 = sbr.rel (%p107) target = $region12
    $region11: #{forward.1} parent=5 // pred_region
      %s111 = ssub.s32 %s8, 1
      // Predicated region
      $region13: #{forward.1} parent=11 // pred_check
        %p112 = pneg %p41
      $region14: #{forward.1} parent=11 // pred_check_branch
        %114 = sbr.rel (%p112) target = $region16
      $region15: #{forward.1} parent=11 // pred_region
        _
      $region16: #{forward.1} parent=11 // pred_fallthru
        _
    $region12: #{forward.1} parent=5 // pred_fallthru
      _
    %p115 = scmp.lt.s32.totalorder %s8, 4
    // Predicated region
    $region17: #{forward.1} parent=5 // pred_check
      %p116 = pneg %p115
    $region18: #{forward.1} parent=5 // pred_check_branch
      %118 = sbr.rel (%p116) target = $region20
    $region19: #{forward.1} parent=5 // pred_region
      // Predicated region
      $region21: #{forward.1} parent=19 // pred_check
        %p119 = pneg %p65
      $region22: #{forward.1} parent=19 // pred_check_branch
        %121 = sbr.rel (%p119) target = $region24
      $region23: #{forward.1} parent=19 // pred_region
        %s122 = smul.u32 %s15, 2
        %s123 = sadd.s32 %s122, %s16
        %s124 = smul.u32 16, %s123
        %p125 = scmp.lt.s32.totalorder %s124, 63
        %s126 = scalar_select %p125, %s124, 63
        %s127 = smul.addr %s126, 4
        %s128 = scalar_lea.vmem %s1, %s127
        %s129 = smul.u32 %s15, 2
        %s130 = sadd.s32 %s129, %s16
        %s131 = smul.u32 16, %s130
      $region24: #{forward.1} parent=19 // pred_fallthru
        _
    $region20: #{forward.1} parent=5 // pred_fallthru
      _
    %p132 = scmp.le.s32.totalorder 1, %s8
    %p133 = scmp.lt.s32.totalorder %s8, 5
    %p134 = pnand %p132, %p133
    %p135 = pneg %p134
    // Predicated region
    $region25: #{forward.1} parent=5 // pred_check
      _
    $region26: #{forward.1} parent=5 // pred_check_branch
      %137 = sbr.rel (%p134) target = $region28
    $region27: #{forward.1} parent=5 // pred_region
      %s138 = ssub.s32 %s8, 1
      %p139 = pneg %p41
      %p140 = pneg %p38
      %s141 = smul.u32 %s17, 2
      %s142 = sadd.s32 %s141, %s18
      %s143 = smul.u32 16, %s142
      %p144 = scmp.lt.s32.totalorder %s143, 63
      %s145 = scalar_select %p144, %s143, 63
      %s146 = smul.addr %s145, 4
      %s147 = scalar_lea.vmem %s1, %s146
      %p148 = pneg %p71
      %p149 = pneg %p68
      %p150 = pneg %p97
      %p151 = pneg %p94
      %p152 = scmp.lt.s32.totalorder %s17, 1
      %s153 = scalar_select %p152, %s17, 1
      %s154 = smul.addr %s153, 9
      %s155 = smul.addr %s154, 8
      %s156 = scalar_lea.vmem %s2, %s155
      %s157 = smul.u32 %s17, 2
      %s158 = sadd.s32 %s157, %s18
      %s159 = smul.u32 16, %s158
      %p160 = scmp.lt.s32.totalorder %s159, 63
      %s161 = scalar_select %p160, %s159, 63
      %s162 = smul.addr %s161, 4
      %s163 = scalar_lea.vmem %s1, %s162
      %s164 = smul.u32 %s17, 2
      %s165 = sadd.s32 %s164, %s18
      %s166 = smul.u32 16, %s165
      %p167 = scmp.lt.s32.totalorder %s17, 1
      %s168 = scalar_select %p167, %s17, 1
      %s169 = smul.addr %s168, 9
      %s170 = smul.addr %s169, 8
      %s171 = scalar_lea.vmem %s2, %s170
      %p172 = scmp.eq.s32.totalorder %s18, 0
      // Predicated region
      $region29: #{forward.1} parent=27 // pred_check
        %p173 = pneg %p172
      $region30: #{forward.1} parent=27 // pred_check_branch
        %175 = sbr.rel (%p173) target = $region32
      $region31: #{forward.1} parent=27 // pred_region
        %176 = vst [vmem:[#allocation2] sm:$0xff] 1e+30
        %177 = vst [vmem:[#allocation2 + $0x8] sm:$0xff] 1e+30
        %178 = vst [vmem:[#allocation2 + $0x10] sm:$0xff] 1e+30
        %179 = vst [vmem:[#allocation2 + $0x18] sm:$0xff] 1e+30
        %180 = vst [vmem:[#allocation2 + $0x20] sm:$0xff] 1e+30
        %181 = vst [vmem:[#allocation2 + $0x28] sm:$0xff] 1e+30
        %182 = vst [vmem:[#allocation2 + $0x30] sm:$0xff] 1e+30
        %183 = vst [vmem:[#allocation2 + $0x38] sm:$0xff] 1e+30
        %184 = vst [vmem:[#allocation2 + $0x40] sm:$0xff] 1e+30
        %185 = vst [vmem:[#allocation2 + $0x48] sm:$0xff] 1e+30
        %186 = vst [vmem:[#allocation2 + $0x50] sm:$0xff] 1e+30
        %187 = vst [vmem:[#allocation2 + $0x58] sm:$0xff] 1e+30
        %188 = vst [vmem:[#allocation2 + $0x60] sm:$0xff] 1e+30
        %189 = vst [vmem:[#allocation2 + $0x68] sm:$0xff] 1e+30
        %190 = vst [vmem:[#allocation2 + $0x70] sm:$0xff] 1e+30
        %191 = vst [vmem:[#allocation2 + $0x78] sm:$0xff] 1e+30
        %192 = vst [vmem:[#allocation2 + $0x80] sm:$0xff] 1e+30
        %193 = vst [vmem:[#allocation2 + $0x88] sm:$0xff] 1e+30
        %194 = vst [vmem:[#allocation2 + $0x90] sm:$0xff] 1e+30
        %195 = vst [vmem:[#allocation2 + $0x98] sm:$0xff] 1e+30
        %196 = vst [vmem:[#allocation2 + $0xa0] sm:$0xff] 1e+30
        %197 = vst [vmem:[#allocation2 + $0xa8] sm:$0xff] 1e+30
        %198 = vst [vmem:[#allocation2 + $0xb0] sm:$0xff] 1e+30
        %199 = vst [vmem:[#allocation2 + $0xb8] sm:$0xff] 1e+30
        %200 = vst [vmem:[#allocation2 + $0xc0] sm:$0xff] 1e+30
        %201 = vst [vmem:[#allocation2 + $0xc8] sm:$0xff] 1e+30
        %202 = vst [vmem:[#allocation2 + $0xd0] sm:$0xff] 1e+30
        %203 = vst [vmem:[#allocation2 + $0xd8] sm:$0xff] 1e+30
        %204 = vst [vmem:[#allocation2 + $0xe0] sm:$0xff] 1e+30
        %205 = vst [vmem:[#allocation2 + $0xe8] sm:$0xff] 1e+30
        %206 = vst [vmem:[#allocation2 + $0xf0] sm:$0xff] 1e+30
        %207 = vst [vmem:[#allocation2 + $0xf8] sm:$0xff] 1e+30
        %208 = vst [vmem:[#allocation2 + $0x100] sm:$0xff] 1e+30
        %209 = vst [vmem:[#allocation2 + $0x108] sm:$0xff] 1e+30
        %210 = vst [vmem:[#allocation2 + $0x110] sm:$0xff] 1e+30
        %211 = vst [vmem:[#allocation2 + $0x118] sm:$0xff] 1e+30
        %212 = vst [vmem:[#allocation2 + $0x120] sm:$0xff] 1e+30
        %213 = vst [vmem:[#allocation2 + $0x128] sm:$0xff] 1e+30
        %214 = vst [vmem:[#allocation2 + $0x130] sm:$0xff] 1e+30
        %215 = vst [vmem:[#allocation2 + $0x138] sm:$0xff] 1e+30
        %216 = vst [vmem:[#allocation2 + $0x140] sm:$0xff] 1e+30
        %217 = vst [vmem:[#allocation2 + $0x148] sm:$0xff] 1e+30
        %218 = vst [vmem:[#allocation2 + $0x150] sm:$0xff] 1e+30
        %219 = vst [vmem:[#allocation2 + $0x158] sm:$0xff] 1e+30
        %220 = vst [vmem:[#allocation2 + $0x160] sm:$0xff] 1e+30
        %221 = vst [vmem:[#allocation2 + $0x168] sm:$0xff] 1e+30
        %222 = vst [vmem:[#allocation2 + $0x170] sm:$0xff] 1e+30
        %223 = vst [vmem:[#allocation2 + $0x178] sm:$0xff] 1e+30
        %224 = vst [vmem:[#allocation2 + $0x180] sm:$0xff] 1e+30
        %225 = vst [vmem:[#allocation2 + $0x188] sm:$0xff] 1e+30
        %226 = vst [vmem:[#allocation2 + $0x190] sm:$0xff] 1e+30
        %227 = vst [vmem:[#allocation2 + $0x198] sm:$0xff] 1e+30
        %228 = vst [vmem:[#allocation2 + $0x1a0] sm:$0xff] 1e+30
        %229 = vst [vmem:[#allocation2 + $0x1a8] sm:$0xff] 1e+30
        %230 = vst [vmem:[#allocation2 + $0x1b0] sm:$0xff] 1e+30
        %231 = vst [vmem:[#allocation2 + $0x1b8] sm:$0xff] 1e+30
        %232 = vst [vmem:[#allocation2 + $0x1c0] sm:$0xff] 1e+30
        %233 = vst [vmem:[#allocation2 + $0x1c8] sm:$0xff] 1e+30
        %234 = vst [vmem:[#allocation2 + $0x1d0] sm:$0xff] 1e+30
        %235 = vst [vmem:[#allocation2 + $0x1d8] sm:$0xff] 1e+30
        %236 = vst [vmem:[#allocation2 + $0x1e0] sm:$0xff] 1e+30
        %237 = vst [vmem:[#allocation2 + $0x1e8] sm:$0xff] 1e+30
        %238 = vst [vmem:[#allocation2 + $0x1f0] sm:$0xff] 1e+30
        %239 = vst [vmem:[#allocation2 + $0x1f8] sm:$0xff] 1e+30
        %240 = vst [vmem:[#allocation2 + $0x200] sm:$0xff] 1e+30
        %241 = vst [vmem:[#allocation2 + $0x208] sm:$0xff] 1e+30
        %242 = vst [vmem:[#allocation2 + $0x210] sm:$0xff] 1e+30
        %243 = vst [vmem:[#allocation2 + $0x218] sm:$0xff] 1e+30
        %244 = vst [vmem:[#allocation2 + $0x220] sm:$0xff] 1e+30
        %245 = vst [vmem:[#allocation2 + $0x228] sm:$0xff] 1e+30
        %246 = vst [vmem:[#allocation2 + $0x230] sm:$0xff] 1e+30
        %247 = vst [vmem:[#allocation2 + $0x238] sm:$0xff] 1e+30
        %248 = vst [vmem:[#allocation2 + $0x240] sm:$0xff] 1e+30
        %249 = vst [vmem:[#allocation2 + $0x248] sm:$0xff] 1e+30
        %250 = vst [vmem:[#allocation2 + $0x250] sm:$0xff] 1e+30
        %251 = vst [vmem:[#allocation2 + $0x258] sm:$0xff] 1e+30
        %252 = vst [vmem:[#allocation2 + $0x260] sm:$0xff] 1e+30
        %253 = vst [vmem:[#allocation2 + $0x268] sm:$0xff] 1e+30
        %254 = vst [vmem:[#allocation2 + $0x270] sm:$0xff] 1e+30
        %255 = vst [vmem:[#allocation2 + $0x278] sm:$0xff] 1e+30
        %256 = vst [vmem:[#allocation2 + $0x280] sm:$0xff] 1e+30
        %257 = vst [vmem:[#allocation2 + $0x288] sm:$0xff] 1e+30
        %258 = vst [vmem:[#allocation2 + $0x290] sm:$0xff] 1e+30
        %259 = vst [vmem:[#allocation2 + $0x298] sm:$0xff] 1e+30
        %260 = vst [vmem:[#allocation2 + $0x2a0] sm:$0xff] 1e+30
        %261 = vst [vmem:[#allocation2 + $0x2a8] sm:$0xff] 1e+30
        %262 = vst [vmem:[#allocation2 + $0x2b0] sm:$0xff] 1e+30
        %263 = vst [vmem:[#allocation2 + $0x2b8] sm:$0xff] 1e+30
        %264 = vst [vmem:[#allocation2 + $0x2c0] sm:$0xff] 1e+30
        %265 = vst [vmem:[#allocation2 + $0x2c8] sm:$0xff] 1e+30
        %266 = vst [vmem:[#allocation2 + $0x2d0] sm:$0xff] 1e+30
        %267 = vst [vmem:[#allocation2 + $0x2d8] sm:$0xff] 1e+30
        %268 = vst [vmem:[#allocation2 + $0x2e0] sm:$0xff] 1e+30
        %269 = vst [vmem:[#allocation2 + $0x2e8] sm:$0xff] 1e+30
        %270 = vst [vmem:[#allocation2 + $0x2f0] sm:$0xff] 1e+30
        %271 = vst [vmem:[#allocation2 + $0x2f8] sm:$0xff] 1e+30
        %272 = vst [vmem:[#allocation2 + $0x300] sm:$0xff] 1e+30
        %273 = vst [vmem:[#allocation2 + $0x308] sm:$0xff] 1e+30
        %274 = vst [vmem:[#allocation2 + $0x310] sm:$0xff] 1e+30
        %275 = vst [vmem:[#allocation2 + $0x318] sm:$0xff] 1e+30
        %276 = vst [vmem:[#allocation2 + $0x320] sm:$0xff] 1e+30
        %277 = vst [vmem:[#allocation2 + $0x328] sm:$0xff] 1e+30
        %278 = vst [vmem:[#allocation2 + $0x330] sm:$0xff] 1e+30
        %279 = vst [vmem:[#allocation2 + $0x338] sm:$0xff] 1e+30
        %280 = vst [vmem:[#allocation2 + $0x340] sm:$0xff] 1e+30
        %281 = vst [vmem:[#allocation2 + $0x348] sm:$0xff] 1e+30
        %282 = vst [vmem:[#allocation2 + $0x350] sm:$0xff] 1e+30
        %283 = vst [vmem:[#allocation2 + $0x358] sm:$0xff] 1e+30
        %284 = vst [vmem:[#allocation2 + $0x360] sm:$0xff] 1e+30
        %285 = vst [vmem:[#allocation2 + $0x368] sm:$0xff] 1e+30
        %286 = vst [vmem:[#allocation2 + $0x370] sm:$0xff] 1e+30
        %287 = vst [vmem:[#allocation2 + $0x378] sm:$0xff] 1e+30
        %288 = vst [vmem:[#allocation2 + $0x380] sm:$0xff] 1e+30
        %289 = vst [vmem:[#allocation2 + $0x388] sm:$0xff] 1e+30
        %290 = vst [vmem:[#allocation2 + $0x390] sm:$0xff] 1e+30
        %291 = vst [vmem:[#allocation2 + $0x398] sm:$0xff] 1e+30
        %292 = vst [vmem:[#allocation2 + $0x3a0] sm:$0xff] 1e+30
        %293 = vst [vmem:[#allocation2 + $0x3a8] sm:$0xff] 1e+30
        %294 = vst [vmem:[#allocation2 + $0x3b0] sm:$0xff] 1e+30
        %295 = vst [vmem:[#allocation2 + $0x3b8] sm:$0xff] 1e+30
        %296 = vst [vmem:[#allocation2 + $0x3c0] sm:$0xff] 1e+30
        %297 = vst [vmem:[#allocation2 + $0x3c8] sm:$0xff] 1e+30
        %298 = vst [vmem:[#allocation2 + $0x3d0] sm:$0xff] 1e+30
        %299 = vst [vmem:[#allocation2 + $0x3d8] sm:$0xff] 1e+30
        %300 = vst [vmem:[#allocation2 + $0x3e0] sm:$0xff] 1e+30
        %301 = vst [vmem:[#allocation2 + $0x3e8] sm:$0xff] 1e+30
        %302 = vst [vmem:[#allocation2 + $0x3f0] sm:$0xff] 1e+30
        %303 = vst [vmem:[#allocation2 + $0x3f8] sm:$0xff] 1e+30
        %304 = vst [vmem:[#allocation2 + $0x400] sm:$0xff] 1e+30
        %305 = vst [vmem:[#allocation2 + $0x408] sm:$0xff] 1e+30
        %306 = vst [vmem:[#allocation2 + $0x410] sm:$0xff] 1e+30
        %307 = vst [vmem:[#allocation2 + $0x418] sm:$0xff] 1e+30
        %308 = vst [vmem:[#allocation2 + $0x420] sm:$0xff] 1e+30
        %309 = vst [vmem:[#allocation2 + $0x428] sm:$0xff] 1e+30
        %310 = vst [vmem:[#allocation2 + $0x430] sm:$0xff] 1e+30
        %311 = vst [vmem:[#allocation2 + $0x438] sm:$0xff] 1e+30
        %312 = vst [vmem:[#allocation2 + $0x440] sm:$0xff] 1e+30
        %313 = vst [vmem:[#allocation2 + $0x448] sm:$0xff] 1e+30
        %314 = vst [vmem:[#allocation2 + $0x450] sm:$0xff] 1e+30
        %315 = vst [vmem:[#allocation2 + $0x458] sm:$0xff] 1e+30
        %316 = vst [vmem:[#allocation2 + $0x460] sm:$0xff] 1e+30
        %317 = vst [vmem:[#allocation2 + $0x468] sm:$0xff] 1e+30
        %318 = vst [vmem:[#allocation2 + $0x470] sm:$0xff] 1e+30
        %319 = vst [vmem:[#allocation2 + $0x478] sm:$0xff] 1e+30
      $region32: #{forward.1} parent=27 // pred_fallthru
        _
      %v320 = vld [vmem:[%s0] sm:$0xff]
      %v321 = vld [vmem:[%s0 + $0x8] sm:$0xff]
      %v322 = vld [vmem:[%s0 + $0x10] sm:$0xff]
      %v323 = vld [vmem:[%s0 + $0x18] sm:$0xff]
      %v324 = vld [vmem:[%s0 + $0x20] sm:$0xff]
      %v325 = vld [vmem:[%s0 + $0x28] sm:$0xff]
      %v326 = vld [vmem:[%s0 + $0x30] sm:$0xff]
      %v327 = vld [vmem:[%s0 + $0x38] sm:$0xff]
      %v328 = vld [vmem:[%s0 + $0x40] sm:$0xff]
      %330 = vset.pattern.permute.xlu0 0
      %331 = vperm.xlu0 %330, %v320
      %v332 = vpop.permute.xlu0 %331
      %335 = vset.pattern.permute.xlu0 0
      %336 = vperm.xlu0 %335, %v321
      %v337 = vpop.permute.xlu0 %336
      %340 = vset.pattern.permute.xlu0 0
      %341 = vperm.xlu0 %340, %v322
      %v342 = vpop.permute.xlu0 %341
      %345 = vset.pattern.permute.xlu0 0
      %346 = vperm.xlu0 %345, %v323
      %v347 = vpop.permute.xlu0 %346
      %350 = vset.pattern.permute.xlu0 0
      %351 = vperm.xlu0 %350, %v324
      %v352 = vpop.permute.xlu0 %351
      %355 = vset.pattern.permute.xlu0 0
      %356 = vperm.xlu0 %355, %v325
      %v357 = vpop.permute.xlu0 %356
      %360 = vset.pattern.permute.xlu0 0
      %361 = vperm.xlu0 %360, %v326
      %v362 = vpop.permute.xlu0 %361
      %365 = vset.pattern.permute.xlu0 0
      %366 = vperm.xlu0 %365, %v327
      %v367 = vpop.permute.xlu0 %366
      %370 = vset.pattern.permute.xlu0 0
      %371 = vperm.xlu0 %370, %v328
      %v372 = vpop.permute.xlu0 %371
      %v374 = vld [vmem:[%s163] ss:$4 sm:$0xff]
      %s375 = scalar_lea.vmem %s163, 32
      %v376 = vld [vmem:[%s375] ss:$4 sm:$0xff]
      %v379 = vlaneseq
      %v380 = vshrl.u32 %v379, 7
      %v381 = vsub.s32 0, %v380
      %v382 = vrot.slane %v374, %v381
      %v383 = vlaneseq
      %v384 = vshrl.u32 %v383, 7
      %v385 = vsub.s32 1, %v384
      %v386 = vrot.slane %v374, %v385
      %v387 = vlaneseq
      %v388 = vshrl.u32 %v387, 7
      %v389 = vsub.s32 2, %v388
      %v390 = vrot.slane %v374, %v389
      %v391 = vlaneseq
      %v392 = vshrl.u32 %v391, 7
      %v393 = vsub.s32 3, %v392
      %v394 = vrot.slane %v374, %v393
      %v395 = vlaneseq
      %v396 = vshrl.u32 %v395, 7
      %v397 = vsub.s32 4, %v396
      %v398 = vrot.slane %v374, %v397
      %v399 = vlaneseq
      %v400 = vshrl.u32 %v399, 7
      %v401 = vsub.s32 5, %v400
      %v402 = vrot.slane %v374, %v401
      %v403 = vlaneseq
      %v404 = vshrl.u32 %v403, 7
      %v405 = vsub.s32 6, %v404
      %v406 = vrot.slane %v374, %v405
      %v407 = vlaneseq
      %v408 = vshrl.u32 %v407, 7
      %v409 = vsub.s32 7, %v408
      %v410 = vrot.slane %v374, %v409
      %v411 = vlaneseq
      %v412 = vshrl.u32 %v411, 7
      %v413 = vsub.s32 0, %v412
      %v414 = vrot.slane %v376, %v413
      %v415 = vlaneseq
      %v416 = vshrl.u32 %v415, 7
      %v417 = vsub.s32 1, %v416
      %v418 = vrot.slane %v376, %v417
      %v419 = vlaneseq
      %v420 = vshrl.u32 %v419, 7
      %v421 = vsub.s32 2, %v420
      %v422 = vrot.slane %v376, %v421
      %v423 = vlaneseq
      %v424 = vshrl.u32 %v423, 7
      %v425 = vsub.s32 3, %v424
      %v426 = vrot.slane %v376, %v425
      %v427 = vlaneseq
      %v428 = vshrl.u32 %v427, 7
      %v429 = vsub.s32 4, %v428
      %v430 = vrot.slane %v376, %v429
      %v431 = vlaneseq
      %v432 = vshrl.u32 %v431, 7
      %v433 = vsub.s32 5, %v432
      %v434 = vrot.slane %v376, %v433
      %v435 = vlaneseq
      %v436 = vshrl.u32 %v435, 7
      %v437 = vsub.s32 6, %v436
      %v438 = vrot.slane %v376, %v437
      %v439 = vlaneseq
      %v440 = vshrl.u32 %v439, 7
      %v441 = vsub.s32 7, %v440
      %v442 = vrot.slane %v376, %v441
      %v459 = vsub.f32 %v332, %v382
      %v460 = vsub.f32 %v332, %v386
      %v461 = vsub.f32 %v332, %v390
      %v462 = vsub.f32 %v332, %v394
      %v463 = vsub.f32 %v332, %v398
      %v464 = vsub.f32 %v332, %v402
      %v465 = vsub.f32 %v332, %v406
      %v466 = vsub.f32 %v332, %v410
      %v467 = vsub.f32 %v332, %v414
      %v468 = vsub.f32 %v332, %v418
      %v469 = vsub.f32 %v332, %v422
      %v470 = vsub.f32 %v332, %v426
      %v471 = vsub.f32 %v332, %v430
      %v472 = vsub.f32 %v332, %v434
      %v473 = vsub.f32 %v332, %v438
      %v474 = vsub.f32 %v332, %v442
      %v475 = vsub.f32 %v337, %v382
      %v476 = vsub.f32 %v337, %v386
      %v477 = vsub.f32 %v337, %v390
      %v478 = vsub.f32 %v337, %v394
      %v479 = vsub.f32 %v337, %v398
      %v480 = vsub.f32 %v337, %v402
      %v481 = vsub.f32 %v337, %v406
      %v482 = vsub.f32 %v337, %v410
      %v483 = vsub.f32 %v337, %v414
      %v484 = vsub.f32 %v337, %v418
      %v485 = vsub.f32 %v337, %v422
      %v486 = vsub.f32 %v337, %v426
      %v487 = vsub.f32 %v337, %v430
      %v488 = vsub.f32 %v337, %v434
      %v489 = vsub.f32 %v337, %v438
      %v490 = vsub.f32 %v337, %v442
      %v491 = vsub.f32 %v342, %v382
      %v492 = vsub.f32 %v342, %v386
      %v493 = vsub.f32 %v342, %v390
      %v494 = vsub.f32 %v342, %v394
      %v495 = vsub.f32 %v342, %v398
      %v496 = vsub.f32 %v342, %v402
      %v497 = vsub.f32 %v342, %v406
      %v498 = vsub.f32 %v342, %v410
      %v499 = vsub.f32 %v342, %v414
      %v500 = vsub.f32 %v342, %v418
      %v501 = vsub.f32 %v342, %v422
      %v502 = vsub.f32 %v342, %v426
      %v503 = vsub.f32 %v342, %v430
      %v504 = vsub.f32 %v342, %v434
      %v505 = vsub.f32 %v342, %v438
      %v506 = vsub.f32 %v342, %v442
      %v507 = vsub.f32 %v347, %v382
      %v508 = vsub.f32 %v347, %v386
      %v509 = vsub.f32 %v347, %v390
      %v510 = vsub.f32 %v347, %v394
      %v511 = vsub.f32 %v347, %v398
      %v512 = vsub.f32 %v347, %v402
      %v513 = vsub.f32 %v347, %v406
      %v514 = vsub.f32 %v347, %v410
      %v515 = vsub.f32 %v347, %v414
      %v516 = vsub.f32 %v347, %v418
      %v517 = vsub.f32 %v347, %v422
      %v518 = vsub.f32 %v347, %v426
      %v519 = vsub.f32 %v347, %v430
      %v520 = vsub.f32 %v347, %v434
      %v521 = vsub.f32 %v347, %v438
      %v522 = vsub.f32 %v347, %v442
      %v523 = vsub.f32 %v352, %v382
      %v524 = vsub.f32 %v352, %v386
      %v525 = vsub.f32 %v352, %v390
      %v526 = vsub.f32 %v352, %v394
      %v527 = vsub.f32 %v352, %v398
      %v528 = vsub.f32 %v352, %v402
      %v529 = vsub.f32 %v352, %v406
      %v530 = vsub.f32 %v352, %v410
      %v531 = vsub.f32 %v352, %v414
      %v532 = vsub.f32 %v352, %v418
      %v533 = vsub.f32 %v352, %v422
      %v534 = vsub.f32 %v352, %v426
      %v535 = vsub.f32 %v352, %v430
      %v536 = vsub.f32 %v352, %v434
      %v537 = vsub.f32 %v352, %v438
      %v538 = vsub.f32 %v352, %v442
      %v539 = vsub.f32 %v357, %v382
      %v540 = vsub.f32 %v357, %v386
      %v541 = vsub.f32 %v357, %v390
      %v542 = vsub.f32 %v357, %v394
      %v543 = vsub.f32 %v357, %v398
      %v544 = vsub.f32 %v357, %v402
      %v545 = vsub.f32 %v357, %v406
      %v546 = vsub.f32 %v357, %v410
      %v547 = vsub.f32 %v357, %v414
      %v548 = vsub.f32 %v357, %v418
      %v549 = vsub.f32 %v357, %v422
      %v550 = vsub.f32 %v357, %v426
      %v551 = vsub.f32 %v357, %v430
      %v552 = vsub.f32 %v357, %v434
      %v553 = vsub.f32 %v357, %v438
      %v554 = vsub.f32 %v357, %v442
      %v555 = vsub.f32 %v362, %v382
      %v556 = vsub.f32 %v362, %v386
      %v557 = vsub.f32 %v362, %v390
      %v558 = vsub.f32 %v362, %v394
      %v559 = vsub.f32 %v362, %v398
      %v560 = vsub.f32 %v362, %v402
      %v561 = vsub.f32 %v362, %v406
      %v562 = vsub.f32 %v362, %v410
      %v563 = vsub.f32 %v362, %v414
      %v564 = vsub.f32 %v362, %v418
      %v565 = vsub.f32 %v362, %v422
      %v566 = vsub.f32 %v362, %v426
      %v567 = vsub.f32 %v362, %v430
      %v568 = vsub.f32 %v362, %v434
      %v569 = vsub.f32 %v362, %v438
      %v570 = vsub.f32 %v362, %v442
      %v571 = vsub.f32 %v367, %v382
      %v572 = vsub.f32 %v367, %v386
      %v573 = vsub.f32 %v367, %v390
      %v574 = vsub.f32 %v367, %v394
      %v575 = vsub.f32 %v367, %v398
      %v576 = vsub.f32 %v367, %v402
      %v577 = vsub.f32 %v367, %v406
      %v578 = vsub.f32 %v367, %v410
      %v579 = vsub.f32 %v367, %v414
      %v580 = vsub.f32 %v367, %v418
      %v581 = vsub.f32 %v367, %v422
      %v582 = vsub.f32 %v367, %v426
      %v583 = vsub.f32 %v367, %v430
      %v584 = vsub.f32 %v367, %v434
      %v585 = vsub.f32 %v367, %v438
      %v586 = vsub.f32 %v367, %v442
      %v587 = vsub.f32 %v372, %v382
      %v588 = vsub.f32 %v372, %v386
      %v589 = vsub.f32 %v372, %v390
      %v590 = vsub.f32 %v372, %v394
      %v591 = vsub.f32 %v372, %v398
      %v592 = vsub.f32 %v372, %v402
      %v593 = vsub.f32 %v372, %v406
      %v594 = vsub.f32 %v372, %v410
      %v595 = vsub.f32 %v372, %v414
      %v596 = vsub.f32 %v372, %v418
      %v597 = vsub.f32 %v372, %v422
      %v598 = vsub.f32 %v372, %v426
      %v599 = vsub.f32 %v372, %v430
      %v600 = vsub.f32 %v372, %v434
      %v601 = vsub.f32 %v372, %v438
      %v602 = vsub.f32 %v372, %v442
      %v603 = vmul.f32 %v459, %v459
      %v604 = vmul.f32 %v460, %v460
      %v605 = vmul.f32 %v461, %v461
      %v606 = vmul.f32 %v462, %v462
      %v607 = vmul.f32 %v463, %v463
      %v608 = vmul.f32 %v464, %v464
      %v609 = vmul.f32 %v465, %v465
      %v610 = vmul.f32 %v466, %v466
      %v611 = vmul.f32 %v467, %v467
      %v612 = vmul.f32 %v468, %v468
      %v613 = vmul.f32 %v469, %v469
      %v614 = vmul.f32 %v470, %v470
      %v615 = vmul.f32 %v471, %v471
      %v616 = vmul.f32 %v472, %v472
      %v617 = vmul.f32 %v473, %v473
      %v618 = vmul.f32 %v474, %v474
      %v619 = vmul.f32 %v475, %v475
      %v620 = vmul.f32 %v476, %v476
      %v621 = vmul.f32 %v477, %v477
      %v622 = vmul.f32 %v478, %v478
      %v623 = vmul.f32 %v479, %v479
      %v624 = vmul.f32 %v480, %v480
      %v625 = vmul.f32 %v481, %v481
      %v626 = vmul.f32 %v482, %v482
      %v627 = vmul.f32 %v483, %v483
      %v628 = vmul.f32 %v484, %v484
      %v629 = vmul.f32 %v485, %v485
      %v630 = vmul.f32 %v486, %v486
      %v631 = vmul.f32 %v487, %v487
      %v632 = vmul.f32 %v488, %v488
      %v633 = vmul.f32 %v489, %v489
      %v634 = vmul.f32 %v490, %v490
      %v635 = vmul.f32 %v491, %v491
      %v636 = vmul.f32 %v492, %v492
      %v637 = vmul.f32 %v493, %v493
      %v638 = vmul.f32 %v494, %v494
      %v639 = vmul.f32 %v495, %v495
      %v640 = vmul.f32 %v496, %v496
      %v641 = vmul.f32 %v497, %v497
      %v642 = vmul.f32 %v498, %v498
      %v643 = vmul.f32 %v499, %v499
      %v644 = vmul.f32 %v500, %v500
      %v645 = vmul.f32 %v501, %v501
      %v646 = vmul.f32 %v502, %v502
      %v647 = vmul.f32 %v503, %v503
      %v648 = vmul.f32 %v504, %v504
      %v649 = vmul.f32 %v505, %v505
      %v650 = vmul.f32 %v506, %v506
      %v651 = vmul.f32 %v507, %v507
      %v652 = vmul.f32 %v508, %v508
      %v653 = vmul.f32 %v509, %v509
      %v654 = vmul.f32 %v510, %v510
      %v655 = vmul.f32 %v511, %v511
      %v656 = vmul.f32 %v512, %v512
      %v657 = vmul.f32 %v513, %v513
      %v658 = vmul.f32 %v514, %v514
      %v659 = vmul.f32 %v515, %v515
      %v660 = vmul.f32 %v516, %v516
      %v661 = vmul.f32 %v517, %v517
      %v662 = vmul.f32 %v518, %v518
      %v663 = vmul.f32 %v519, %v519
      %v664 = vmul.f32 %v520, %v520
      %v665 = vmul.f32 %v521, %v521
      %v666 = vmul.f32 %v522, %v522
      %v667 = vmul.f32 %v523, %v523
      %v668 = vmul.f32 %v524, %v524
      %v669 = vmul.f32 %v525, %v525
      %v670 = vmul.f32 %v526, %v526
      %v671 = vmul.f32 %v527, %v527
      %v672 = vmul.f32 %v528, %v528
      %v673 = vmul.f32 %v529, %v529
      %v674 = vmul.f32 %v530, %v530
      %v675 = vmul.f32 %v531, %v531
      %v676 = vmul.f32 %v532, %v532
      %v677 = vmul.f32 %v533, %v533
      %v678 = vmul.f32 %v534, %v534
      %v679 = vmul.f32 %v535, %v535
      %v680 = vmul.f32 %v536, %v536
      %v681 = vmul.f32 %v537, %v537
      %v682 = vmul.f32 %v538, %v538
      %v683 = vmul.f32 %v539, %v539
      %v684 = vmul.f32 %v540, %v540
      %v685 = vmul.f32 %v541, %v541
      %v686 = vmul.f32 %v542, %v542
      %v687 = vmul.f32 %v543, %v543
      %v688 = vmul.f32 %v544, %v544
      %v689 = vmul.f32 %v545, %v545
      %v690 = vmul.f32 %v546, %v546
      %v691 = vmul.f32 %v547, %v547
      %v692 = vmul.f32 %v548, %v548
      %v693 = vmul.f32 %v549, %v549
      %v694 = vmul.f32 %v550, %v550
      %v695 = vmul.f32 %v551, %v551
      %v696 = vmul.f32 %v552, %v552
      %v697 = vmul.f32 %v553, %v553
      %v698 = vmul.f32 %v554, %v554
      %v699 = vmul.f32 %v555, %v555
      %v700 = vmul.f32 %v556, %v556
      %v701 = vmul.f32 %v557, %v557
      %v702 = vmul.f32 %v558, %v558
      %v703 = vmul.f32 %v559, %v559
      %v704 = vmul.f32 %v560, %v560
      %v705 = vmul.f32 %v561, %v561
      %v706 = vmul.f32 %v562, %v562
      %v707 = vmul.f32 %v563, %v563
      %v708 = vmul.f32 %v564, %v564
      %v709 = vmul.f32 %v565, %v565
      %v710 = vmul.f32 %v566, %v566
      %v711 = vmul.f32 %v567, %v567
      %v712 = vmul.f32 %v568, %v568
      %v713 = vmul.f32 %v569, %v569
      %v714 = vmul.f32 %v570, %v570
      %v715 = vmul.f32 %v571, %v571
      %v716 = vmul.f32 %v572, %v572
      %v717 = vmul.f32 %v573, %v573
      %v718 = vmul.f32 %v574, %v574
      %v719 = vmul.f32 %v575, %v575
      %v720 = vmul.f32 %v576, %v576
      %v721 = vmul.f32 %v577, %v577
      %v722 = vmul.f32 %v578, %v578
      %v723 = vmul.f32 %v579, %v579
      %v724 = vmul.f32 %v580, %v580
      %v725 = vmul.f32 %v581, %v581
      %v726 = vmul.f32 %v582, %v582
      %v727 = vmul.f32 %v583, %v583
      %v728 = vmul.f32 %v584, %v584
      %v729 = vmul.f32 %v585, %v585
      %v730 = vmul.f32 %v586, %v586
      %v731 = vmul.f32 %v587, %v587
      %v732 = vmul.f32 %v588, %v588
      %v733 = vmul.f32 %v589, %v589
      %v734 = vmul.f32 %v590, %v590
      %v735 = vmul.f32 %v591, %v591
      %v736 = vmul.f32 %v592, %v592
      %v737 = vmul.f32 %v593, %v593
      %v738 = vmul.f32 %v594, %v594
      %v739 = vmul.f32 %v595, %v595
      %v740 = vmul.f32 %v596, %v596
      %v741 = vmul.f32 %v597, %v597
      %v742 = vmul.f32 %v598, %v598
      %v743 = vmul.f32 %v599, %v599
      %v744 = vmul.f32 %v600, %v600
      %v745 = vmul.f32 %v601, %v601
      %v746 = vmul.f32 %v602, %v602
      %v747 = vadd.f32 %v603, 0.0
      %v748 = vadd.f32 %v604, 0.0
      %v749 = vadd.f32 %v605, 0.0
      %v750 = vadd.f32 %v606, 0.0
      %v751 = vadd.f32 %v607, 0.0
      %v752 = vadd.f32 %v608, 0.0
      %v753 = vadd.f32 %v609, 0.0
      %v754 = vadd.f32 %v610, 0.0
      %v755 = vadd.f32 %v611, 0.0
      %v756 = vadd.f32 %v612, 0.0
      %v757 = vadd.f32 %v613, 0.0
      %v758 = vadd.f32 %v614, 0.0
      %v759 = vadd.f32 %v615, 0.0
      %v760 = vadd.f32 %v616, 0.0
      %v761 = vadd.f32 %v617, 0.0
      %v762 = vadd.f32 %v618, 0.0
      %v763 = vadd.f32 %v619, 0.0
      %v764 = vadd.f32 %v620, 0.0
      %v765 = vadd.f32 %v621, 0.0
      %v766 = vadd.f32 %v622, 0.0
      %v767 = vadd.f32 %v623, 0.0
      %v768 = vadd.f32 %v624, 0.0
      %v769 = vadd.f32 %v625, 0.0
      %v770 = vadd.f32 %v626, 0.0
      %v771 = vadd.f32 %v627, 0.0
      %v772 = vadd.f32 %v628, 0.0
      %v773 = vadd.f32 %v629, 0.0
      %v774 = vadd.f32 %v630, 0.0
      %v775 = vadd.f32 %v631, 0.0
      %v776 = vadd.f32 %v632, 0.0
      %v777 = vadd.f32 %v633, 0.0
      %v778 = vadd.f32 %v634, 0.0
      %v779 = vadd.f32 %v635, 0.0
      %v780 = vadd.f32 %v636, 0.0
      %v781 = vadd.f32 %v637, 0.0
      %v782 = vadd.f32 %v638, 0.0
      %v783 = vadd.f32 %v639, 0.0
      %v784 = vadd.f32 %v640, 0.0
      %v785 = vadd.f32 %v641, 0.0
      %v786 = vadd.f32 %v642, 0.0
      %v787 = vadd.f32 %v643, 0.0
      %v788 = vadd.f32 %v644, 0.0
      %v789 = vadd.f32 %v645, 0.0
      %v790 = vadd.f32 %v646, 0.0
      %v791 = vadd.f32 %v647, 0.0
      %v792 = vadd.f32 %v648, 0.0
      %v793 = vadd.f32 %v649, 0.0
      %v794 = vadd.f32 %v650, 0.0
      %v795 = vadd.f32 %v651, 0.0
      %v796 = vadd.f32 %v652, 0.0
      %v797 = vadd.f32 %v653, 0.0
      %v798 = vadd.f32 %v654, 0.0
      %v799 = vadd.f32 %v655, 0.0
      %v800 = vadd.f32 %v656, 0.0
      %v801 = vadd.f32 %v657, 0.0
      %v802 = vadd.f32 %v658, 0.0
      %v803 = vadd.f32 %v659, 0.0
      %v804 = vadd.f32 %v660, 0.0
      %v805 = vadd.f32 %v661, 0.0
      %v806 = vadd.f32 %v662, 0.0
      %v807 = vadd.f32 %v663, 0.0
      %v808 = vadd.f32 %v664, 0.0
      %v809 = vadd.f32 %v665, 0.0
      %v810 = vadd.f32 %v666, 0.0
      %v811 = vadd.f32 %v667, 0.0
      %v812 = vadd.f32 %v668, 0.0
      %v813 = vadd.f32 %v669, 0.0
      %v814 = vadd.f32 %v670, 0.0
      %v815 = vadd.f32 %v671, 0.0
      %v816 = vadd.f32 %v672, 0.0
      %v817 = vadd.f32 %v673, 0.0
      %v818 = vadd.f32 %v674, 0.0
      %v819 = vadd.f32 %v675, 0.0
      %v820 = vadd.f32 %v676, 0.0
      %v821 = vadd.f32 %v677, 0.0
      %v822 = vadd.f32 %v678, 0.0
      %v823 = vadd.f32 %v679, 0.0
      %v824 = vadd.f32 %v680, 0.0
      %v825 = vadd.f32 %v681, 0.0
      %v826 = vadd.f32 %v682, 0.0
      %v827 = vadd.f32 %v683, 0.0
      %v828 = vadd.f32 %v684, 0.0
      %v829 = vadd.f32 %v685, 0.0
      %v830 = vadd.f32 %v686, 0.0
      %v831 = vadd.f32 %v687, 0.0
      %v832 = vadd.f32 %v688, 0.0
      %v833 = vadd.f32 %v689, 0.0
      %v834 = vadd.f32 %v690, 0.0
      %v835 = vadd.f32 %v691, 0.0
      %v836 = vadd.f32 %v692, 0.0
      %v837 = vadd.f32 %v693, 0.0
      %v838 = vadd.f32 %v694, 0.0
      %v839 = vadd.f32 %v695, 0.0
      %v840 = vadd.f32 %v696, 0.0
      %v841 = vadd.f32 %v697, 0.0
      %v842 = vadd.f32 %v698, 0.0
      %v843 = vadd.f32 %v699, 0.0
      %v844 = vadd.f32 %v700, 0.0
      %v845 = vadd.f32 %v701, 0.0
      %v846 = vadd.f32 %v702, 0.0
      %v847 = vadd.f32 %v703, 0.0
      %v848 = vadd.f32 %v704, 0.0
      %v849 = vadd.f32 %v705, 0.0
      %v850 = vadd.f32 %v706, 0.0
      %v851 = vadd.f32 %v707, 0.0
      %v852 = vadd.f32 %v708, 0.0
      %v853 = vadd.f32 %v709, 0.0
      %v854 = vadd.f32 %v710, 0.0
      %v855 = vadd.f32 %v711, 0.0
      %v856 = vadd.f32 %v712, 0.0
      %v857 = vadd.f32 %v713, 0.0
      %v858 = vadd.f32 %v714, 0.0
      %v859 = vadd.f32 %v715, 0.0
      %v860 = vadd.f32 %v716, 0.0
      %v861 = vadd.f32 %v717, 0.0
      %v862 = vadd.f32 %v718, 0.0
      %v863 = vadd.f32 %v719, 0.0
      %v864 = vadd.f32 %v720, 0.0
      %v865 = vadd.f32 %v721, 0.0
      %v866 = vadd.f32 %v722, 0.0
      %v867 = vadd.f32 %v723, 0.0
      %v868 = vadd.f32 %v724, 0.0
      %v869 = vadd.f32 %v725, 0.0
      %v870 = vadd.f32 %v726, 0.0
      %v871 = vadd.f32 %v727, 0.0
      %v872 = vadd.f32 %v728, 0.0
      %v873 = vadd.f32 %v729, 0.0
      %v874 = vadd.f32 %v730, 0.0
      %v875 = vadd.f32 %v731, 0.0
      %v876 = vadd.f32 %v732, 0.0
      %v877 = vadd.f32 %v733, 0.0
      %v878 = vadd.f32 %v734, 0.0
      %v879 = vadd.f32 %v735, 0.0
      %v880 = vadd.f32 %v736, 0.0
      %v881 = vadd.f32 %v737, 0.0
      %v882 = vadd.f32 %v738, 0.0
      %v883 = vadd.f32 %v739, 0.0
      %v884 = vadd.f32 %v740, 0.0
      %v885 = vadd.f32 %v741, 0.0
      %v886 = vadd.f32 %v742, 0.0
      %v887 = vadd.f32 %v743, 0.0
      %v888 = vadd.f32 %v744, 0.0
      %v889 = vadd.f32 %v745, 0.0
      %v890 = vadd.f32 %v746, 0.0
      %891 = vset.pattern.permute.xlu0 1
      %892 = vperm.xlu0 %891, %v320
      %v893 = vpop.permute.xlu0 %892
      %895 = vset.pattern.permute.xlu0 1
      %896 = vperm.xlu0 %895, %v321
      %v897 = vpop.permute.xlu0 %896
      %899 = vset.pattern.permute.xlu0 1
      %900 = vperm.xlu0 %899, %v322
      %v901 = vpop.permute.xlu0 %900
      %903 = vset.pattern.permute.xlu0 1
      %904 = vperm.xlu0 %903, %v323
      %v905 = vpop.permute.xlu0 %904
      %907 = vset.pattern.permute.xlu0 1
      %908 = vperm.xlu0 %907, %v324
      %v909 = vpop.permute.xlu0 %908
      %911 = vset.pattern.permute.xlu0 1
      %912 = vperm.xlu0 %911, %v325
      %v913 = vpop.permute.xlu0 %912
      %915 = vset.pattern.permute.xlu0 1
      %916 = vperm.xlu0 %915, %v326
      %v917 = vpop.permute.xlu0 %916
      %919 = vset.pattern.permute.xlu0 1
      %920 = vperm.xlu0 %919, %v327
      %v921 = vpop.permute.xlu0 %920
      %923 = vset.pattern.permute.xlu0 1
      %924 = vperm.xlu0 %923, %v328
      %v925 = vpop.permute.xlu0 %924
      %s927 = scalar_lea.vmem %s163, 1
      %v928 = vld [vmem:[%s927] ss:$4 sm:$0xff]
      %s929 = scalar_lea.vmem %s163, 33
      %v930 = vld [vmem:[%s929] ss:$4 sm:$0xff]
      %v933 = vlaneseq
      %v934 = vshrl.u32 %v933, 7
      %v935 = vsub.s32 0, %v934
      %v936 = vrot.slane %v928, %v935
      %v937 = vlaneseq
      %v938 = vshrl.u32 %v937, 7
      %v939 = vsub.s32 1, %v938
      %v940 = vrot.slane %v928, %v939
      %v941 = vlaneseq
      %v942 = vshrl.u32 %v941, 7
      %v943 = vsub.s32 2, %v942
      %v944 = vrot.slane %v928, %v943
      %v945 = vlaneseq
      %v946 = vshrl.u32 %v945, 7
      %v947 = vsub.s32 3, %v946
      %v948 = vrot.slane %v928, %v947
      %v949 = vlaneseq
      %v950 = vshrl.u32 %v949, 7
      %v951 = vsub.s32 4, %v950
      %v952 = vrot.slane %v928, %v951
      %v953 = vlaneseq
      %v954 = vshrl.u32 %v953, 7
      %v955 = vsub.s32 5, %v954
      %v956 = vrot.slane %v928, %v955
      %v957 = vlaneseq
      %v958 = vshrl.u32 %v957, 7
      %v959 = vsub.s32 6, %v958
      %v960 = vrot.slane %v928, %v959
      %v961 = vlaneseq
      %v962 = vshrl.u32 %v961, 7
      %v963 = vsub.s32 7, %v962
      %v964 = vrot.slane %v928, %v963
      %v965 = vlaneseq
      %v966 = vshrl.u32 %v965, 7
      %v967 = vsub.s32 0, %v966
      %v968 = vrot.slane %v930, %v967
      %v969 = vlaneseq
      %v970 = vshrl.u32 %v969, 7
      %v971 = vsub.s32 1, %v970
      %v972 = vrot.slane %v930, %v971
      %v973 = vlaneseq
      %v974 = vshrl.u32 %v973, 7
      %v975 = vsub.s32 2, %v974
      %v976 = vrot.slane %v930, %v975
      %v977 = vlaneseq
      %v978 = vshrl.u32 %v977, 7
      %v979 = vsub.s32 3, %v978
      %v980 = vrot.slane %v930, %v979
      %v981 = vlaneseq
      %v982 = vshrl.u32 %v981, 7
      %v983 = vsub.s32 4, %v982
      %v984 = vrot.slane %v930, %v983
      %v985 = vlaneseq
      %v986 = vshrl.u32 %v985, 7
      %v987 = vsub.s32 5, %v986
      %v988 = vrot.slane %v930, %v987
      %v989 = vlaneseq
      %v990 = vshrl.u32 %v989, 7
      %v991 = vsub.s32 6, %v990
      %v992 = vrot.slane %v930, %v991
      %v993 = vlaneseq
      %v994 = vshrl.u32 %v993, 7
      %v995 = vsub.s32 7, %v994
      %v996 = vrot.slane %v930, %v995
      %v1013 = vsub.f32 %v893, %v936
      %v1014 = vsub.f32 %v893, %v940
      %v1015 = vsub.f32 %v893, %v944
      %v1016 = vsub.f32 %v893, %v948
      %v1017 = vsub.f32 %v893, %v952
      %v1018 = vsub.f32 %v893, %v956
      %v1019 = vsub.f32 %v893, %v960
      %v1020 = vsub.f32 %v893, %v964
      %v1021 = vsub.f32 %v893, %v968
      %v1022 = vsub.f32 %v893, %v972
      %v1023 = vsub.f32 %v893, %v976
      %v1024 = vsub.f32 %v893, %v980
      %v1025 = vsub.f32 %v893, %v984
      %v1026 = vsub.f32 %v893, %v988
      %v1027 = vsub.f32 %v893, %v992
      %v1028 = vsub.f32 %v893, %v996
      %v1029 = vsub.f32 %v897, %v936
      %v1030 = vsub.f32 %v897, %v940
      %v1031 = vsub.f32 %v897, %v944
      %v1032 = vsub.f32 %v897, %v948
      %v1033 = vsub.f32 %v897, %v952
      %v1034 = vsub.f32 %v897, %v956
      %v1035 = vsub.f32 %v897, %v960
      %v1036 = vsub.f32 %v897, %v964
      %v1037 = vsub.f32 %v897, %v968
      %v1038 = vsub.f32 %v897, %v972
      %v1039 = vsub.f32 %v897, %v976
      %v1040 = vsub.f32 %v897, %v980
      %v1041 = vsub.f32 %v897, %v984
      %v1042 = vsub.f32 %v897, %v988
      %v1043 = vsub.f32 %v897, %v992
      %v1044 = vsub.f32 %v897, %v996
      %v1045 = vsub.f32 %v901, %v936
      %v1046 = vsub.f32 %v901, %v940
      %v1047 = vsub.f32 %v901, %v944
      %v1048 = vsub.f32 %v901, %v948
      %v1049 = vsub.f32 %v901, %v952
      %v1050 = vsub.f32 %v901, %v956
      %v1051 = vsub.f32 %v901, %v960
      %v1052 = vsub.f32 %v901, %v964
      %v1053 = vsub.f32 %v901, %v968
      %v1054 = vsub.f32 %v901, %v972
      %v1055 = vsub.f32 %v901, %v976
      %v1056 = vsub.f32 %v901, %v980
      %v1057 = vsub.f32 %v901, %v984
      %v1058 = vsub.f32 %v901, %v988
      %v1059 = vsub.f32 %v901, %v992
      %v1060 = vsub.f32 %v901, %v996
      %v1061 = vsub.f32 %v905, %v936
      %v1062 = vsub.f32 %v905, %v940
      %v1063 = vsub.f32 %v905, %v944
      %v1064 = vsub.f32 %v905, %v948
      %v1065 = vsub.f32 %v905, %v952
      %v1066 = vsub.f32 %v905, %v956
      %v1067 = vsub.f32 %v905, %v960
      %v1068 = vsub.f32 %v905, %v964
      %v1069 = vsub.f32 %v905, %v968
      %v1070 = vsub.f32 %v905, %v972
      %v1071 = vsub.f32 %v905, %v976
      %v1072 = vsub.f32 %v905, %v980
      %v1073 = vsub.f32 %v905, %v984
      %v1074 = vsub.f32 %v905, %v988
      %v1075 = vsub.f32 %v905, %v992
      %v1076 = vsub.f32 %v905, %v996
      %v1077 = vsub.f32 %v909, %v936
      %v1078 = vsub.f32 %v909, %v940
      %v1079 = vsub.f32 %v909, %v944
      %v1080 = vsub.f32 %v909, %v948
      %v1081 = vsub.f32 %v909, %v952
      %v1082 = vsub.f32 %v909, %v956
      %v1083 = vsub.f32 %v909, %v960
      %v1084 = vsub.f32 %v909, %v964
      %v1085 = vsub.f32 %v909, %v968
      %v1086 = vsub.f32 %v909, %v972
      %v1087 = vsub.f32 %v909, %v976
      %v1088 = vsub.f32 %v909, %v980
      %v1089 = vsub.f32 %v909, %v984
      %v1090 = vsub.f32 %v909, %v988
      %v1091 = vsub.f32 %v909, %v992
      %v1092 = vsub.f32 %v909, %v996
      %v1093 = vsub.f32 %v913, %v936
      %v1094 = vsub.f32 %v913, %v940
      %v1095 = vsub.f32 %v913, %v944
      %v1096 = vsub.f32 %v913, %v948
      %v1097 = vsub.f32 %v913, %v952
      %v1098 = vsub.f32 %v913, %v956
      %v1099 = vsub.f32 %v913, %v960
      %v1100 = vsub.f32 %v913, %v964
      %v1101 = vsub.f32 %v913, %v968
      %v1102 = vsub.f32 %v913, %v972
      %v1103 = vsub.f32 %v913, %v976
      %v1104 = vsub.f32 %v913, %v980
      %v1105 = vsub.f32 %v913, %v984
      %v1106 = vsub.f32 %v913, %v988
      %v1107 = vsub.f32 %v913, %v992
      %v1108 = vsub.f32 %v913, %v996
      %v1109 = vsub.f32 %v917, %v936
      %v1110 = vsub.f32 %v917, %v940
      %v1111 = vsub.f32 %v917, %v944
      %v1112 = vsub.f32 %v917, %v948
      %v1113 = vsub.f32 %v917, %v952
      %v1114 = vsub.f32 %v917, %v956
      %v1115 = vsub.f32 %v917, %v960
      %v1116 = vsub.f32 %v917, %v964
      %v1117 = vsub.f32 %v917, %v968
      %v1118 = vsub.f32 %v917, %v972
      %v1119 = vsub.f32 %v917, %v976
      %v1120 = vsub.f32 %v917, %v980
      %v1121 = vsub.f32 %v917, %v984
      %v1122 = vsub.f32 %v917, %v988
      %v1123 = vsub.f32 %v917, %v992
      %v1124 = vsub.f32 %v917, %v996
      %v1125 = vsub.f32 %v921, %v936
      %v1126 = vsub.f32 %v921, %v940
      %v1127 = vsub.f32 %v921, %v944
      %v1128 = vsub.f32 %v921, %v948
      %v1129 = vsub.f32 %v921, %v952
      %v1130 = vsub.f32 %v921, %v956
      %v1131 = vsub.f32 %v921, %v960
      %v1132 = vsub.f32 %v921, %v964
      %v1133 = vsub.f32 %v921, %v968
      %v1134 = vsub.f32 %v921, %v972
      %v1135 = vsub.f32 %v921, %v976
      %v1136 = vsub.f32 %v921, %v980
      %v1137 = vsub.f32 %v921, %v984
      %v1138 = vsub.f32 %v921, %v988
      %v1139 = vsub.f32 %v921, %v992
      %v1140 = vsub.f32 %v921, %v996
      %v1141 = vsub.f32 %v925, %v936
      %v1142 = vsub.f32 %v925, %v940
      %v1143 = vsub.f32 %v925, %v944
      %v1144 = vsub.f32 %v925, %v948
      %v1145 = vsub.f32 %v925, %v952
      %v1146 = vsub.f32 %v925, %v956
      %v1147 = vsub.f32 %v925, %v960
      %v1148 = vsub.f32 %v925, %v964
      %v1149 = vsub.f32 %v925, %v968
      %v1150 = vsub.f32 %v925, %v972
      %v1151 = vsub.f32 %v925, %v976
      %v1152 = vsub.f32 %v925, %v980
      %v1153 = vsub.f32 %v925, %v984
      %v1154 = vsub.f32 %v925, %v988
      %v1155 = vsub.f32 %v925, %v992
      %v1156 = vsub.f32 %v925, %v996
      %v1157 = vmul.f32 %v1013, %v1013
      %v1158 = vmul.f32 %v1014, %v1014
      %v1159 = vmul.f32 %v1015, %v1015
      %v1160 = vmul.f32 %v1016, %v1016
      %v1161 = vmul.f32 %v1017, %v1017
      %v1162 = vmul.f32 %v1018, %v1018
      %v1163 = vmul.f32 %v1019, %v1019
      %v1164 = vmul.f32 %v1020, %v1020
      %v1165 = vmul.f32 %v1021, %v1021
      %v1166 = vmul.f32 %v1022, %v1022
      %v1167 = vmul.f32 %v1023, %v1023
      %v1168 = vmul.f32 %v1024, %v1024
      %v1169 = vmul.f32 %v1025, %v1025
      %v1170 = vmul.f32 %v1026, %v1026
      %v1171 = vmul.f32 %v1027, %v1027
      %v1172 = vmul.f32 %v1028, %v1028
      %v1173 = vmul.f32 %v1029, %v1029
      %v1174 = vmul.f32 %v1030, %v1030
      %v1175 = vmul.f32 %v1031, %v1031
      %v1176 = vmul.f32 %v1032, %v1032
      %v1177 = vmul.f32 %v1033, %v1033
      %v1178 = vmul.f32 %v1034, %v1034
      %v1179 = vmul.f32 %v1035, %v1035
      %v1180 = vmul.f32 %v1036, %v1036
      %v1181 = vmul.f32 %v1037, %v1037
      %v1182 = vmul.f32 %v1038, %v1038
      %v1183 = vmul.f32 %v1039, %v1039
      %v1184 = vmul.f32 %v1040, %v1040
      %v1185 = vmul.f32 %v1041, %v1041
      %v1186 = vmul.f32 %v1042, %v1042
      %v1187 = vmul.f32 %v1043, %v1043
      %v1188 = vmul.f32 %v1044, %v1044
      %v1189 = vmul.f32 %v1045, %v1045
      %v1190 = vmul.f32 %v1046, %v1046
      %v1191 = vmul.f32 %v1047, %v1047
      %v1192 = vmul.f32 %v1048, %v1048
      %v1193 = vmul.f32 %v1049, %v1049
      %v1194 = vmul.f32 %v1050, %v1050
      %v1195 = vmul.f32 %v1051, %v1051
      %v1196 = vmul.f32 %v1052, %v1052
      %v1197 = vmul.f32 %v1053, %v1053
      %v1198 = vmul.f32 %v1054, %v1054
      %v1199 = vmul.f32 %v1055, %v1055
      %v1200 = vmul.f32 %v1056, %v1056
      %v1201 = vmul.f32 %v1057, %v1057
      %v1202 = vmul.f32 %v1058, %v1058
      %v1203 = vmul.f32 %v1059, %v1059
      %v1204 = vmul.f32 %v1060, %v1060
      %v1205 = vmul.f32 %v1061, %v1061
      %v1206 = vmul.f32 %v1062, %v1062
      %v1207 = vmul.f32 %v1063, %v1063
      %v1208 = vmul.f32 %v1064, %v1064
      %v1209 = vmul.f32 %v1065, %v1065
      %v1210 = vmul.f32 %v1066, %v1066
      %v1211 = vmul.f32 %v1067, %v1067
      %v1212 = vmul.f32 %v1068, %v1068
      %v1213 = vmul.f32 %v1069, %v1069
      %v1214 = vmul.f32 %v1070, %v1070
      %v1215 = vmul.f32 %v1071, %v1071
      %v1216 = vmul.f32 %v1072, %v1072
      %v1217 = vmul.f32 %v1073, %v1073
      %v1218 = vmul.f32 %v1074, %v1074
      %v1219 = vmul.f32 %v1075, %v1075
      %v1220 = vmul.f32 %v1076, %v1076
      %v1221 = vmul.f32 %v1077, %v1077
      %v1222 = vmul.f32 %v1078, %v1078
      %v1223 = vmul.f32 %v1079, %v1079
      %v1224 = vmul.f32 %v1080, %v1080
      %v1225 = vmul.f32 %v1081, %v1081
      %v1226 = vmul.f32 %v1082, %v1082
      %v1227 = vmul.f32 %v1083, %v1083
      %v1228 = vmul.f32 %v1084, %v1084
      %v1229 = vmul.f32 %v1085, %v1085
      %v1230 = vmul.f32 %v1086, %v1086
      %v1231 = vmul.f32 %v1087, %v1087
      %v1232 = vmul.f32 %v1088, %v1088
      %v1233 = vmul.f32 %v1089, %v1089
      %v1234 = vmul.f32 %v1090, %v1090
      %v1235 = vmul.f32 %v1091, %v1091
      %v1236 = vmul.f32 %v1092, %v1092
      %v1237 = vmul.f32 %v1093, %v1093
      %v1238 = vmul.f32 %v1094, %v1094
      %v1239 = vmul.f32 %v1095, %v1095
      %v1240 = vmul.f32 %v1096, %v1096
      %v1241 = vmul.f32 %v1097, %v1097
      %v1242 = vmul.f32 %v1098, %v1098
      %v1243 = vmul.f32 %v1099, %v1099
      %v1244 = vmul.f32 %v1100, %v1100
      %v1245 = vmul.f32 %v1101, %v1101
      %v1246 = vmul.f32 %v1102, %v1102
      %v1247 = vmul.f32 %v1103, %v1103
      %v1248 = vmul.f32 %v1104, %v1104
      %v1249 = vmul.f32 %v1105, %v1105
      %v1250 = vmul.f32 %v1106, %v1106
      %v1251 = vmul.f32 %v1107, %v1107
      %v1252 = vmul.f32 %v1108, %v1108
      %v1253 = vmul.f32 %v1109, %v1109
      %v1254 = vmul.f32 %v1110, %v1110
      %v1255 = vmul.f32 %v1111, %v1111
      %v1256 = vmul.f32 %v1112, %v1112
      %v1257 = vmul.f32 %v1113, %v1113
      %v1258 = vmul.f32 %v1114, %v1114
      %v1259 = vmul.f32 %v1115, %v1115
      %v1260 = vmul.f32 %v1116, %v1116
      %v1261 = vmul.f32 %v1117, %v1117
      %v1262 = vmul.f32 %v1118, %v1118
      %v1263 = vmul.f32 %v1119, %v1119
      %v1264 = vmul.f32 %v1120, %v1120
      %v1265 = vmul.f32 %v1121, %v1121
      %v1266 = vmul.f32 %v1122, %v1122
      %v1267 = vmul.f32 %v1123, %v1123
      %v1268 = vmul.f32 %v1124, %v1124
      %v1269 = vmul.f32 %v1125, %v1125
      %v1270 = vmul.f32 %v1126, %v1126
      %v1271 = vmul.f32 %v1127, %v1127
      %v1272 = vmul.f32 %v1128, %v1128
      %v1273 = vmul.f32 %v1129, %v1129
      %v1274 = vmul.f32 %v1130, %v1130
      %v1275 = vmul.f32 %v1131, %v1131
      %v1276 = vmul.f32 %v1132, %v1132
      %v1277 = vmul.f32 %v1133, %v1133
      %v1278 = vmul.f32 %v1134, %v1134
      %v1279 = vmul.f32 %v1135, %v1135
      %v1280 = vmul.f32 %v1136, %v1136
      %v1281 = vmul.f32 %v1137, %v1137
      %v1282 = vmul.f32 %v1138, %v1138
      %v1283 = vmul.f32 %v1139, %v1139
      %v1284 = vmul.f32 %v1140, %v1140
      %v1285 = vmul.f32 %v1141, %v1141
      %v1286 = vmul.f32 %v1142, %v1142
      %v1287 = vmul.f32 %v1143, %v1143
      %v1288 = vmul.f32 %v1144, %v1144
      %v1289 = vmul.f32 %v1145, %v1145
      %v1290 = vmul.f32 %v1146, %v1146
      %v1291 = vmul.f32 %v1147, %v1147
      %v1292 = vmul.f32 %v1148, %v1148
      %v1293 = vmul.f32 %v1149, %v1149
      %v1294 = vmul.f32 %v1150, %v1150
      %v1295 = vmul.f32 %v1151, %v1151
      %v1296 = vmul.f32 %v1152, %v1152
      %v1297 = vmul.f32 %v1153, %v1153
      %v1298 = vmul.f32 %v1154, %v1154
      %v1299 = vmul.f32 %v1155, %v1155
      %v1300 = vmul.f32 %v1156, %v1156
      %v1301 = vadd.f32 %v747, %v1157
      %v1302 = vadd.f32 %v748, %v1158
      %v1303 = vadd.f32 %v749, %v1159
      %v1304 = vadd.f32 %v750, %v1160
      %v1305 = vadd.f32 %v751, %v1161
      %v1306 = vadd.f32 %v752, %v1162
      %v1307 = vadd.f32 %v753, %v1163
      %v1308 = vadd.f32 %v754, %v1164
      %v1309 = vadd.f32 %v755, %v1165
      %v1310 = vadd.f32 %v756, %v1166
      %v1311 = vadd.f32 %v757, %v1167
      %v1312 = vadd.f32 %v758, %v1168
      %v1313 = vadd.f32 %v759, %v1169
      %v1314 = vadd.f32 %v760, %v1170
      %v1315 = vadd.f32 %v761, %v1171
      %v1316 = vadd.f32 %v762, %v1172
      %v1317 = vadd.f32 %v763, %v1173
      %v1318 = vadd.f32 %v764, %v1174
      %v1319 = vadd.f32 %v765, %v1175
      %v1320 = vadd.f32 %v766, %v1176
      %v1321 = vadd.f32 %v767, %v1177
      %v1322 = vadd.f32 %v768, %v1178
      %v1323 = vadd.f32 %v769, %v1179
      %v1324 = vadd.f32 %v770, %v1180
      %v1325 = vadd.f32 %v771, %v1181
      %v1326 = vadd.f32 %v772, %v1182
      %v1327 = vadd.f32 %v773, %v1183
      %v1328 = vadd.f32 %v774, %v1184
      %v1329 = vadd.f32 %v775, %v1185
      %v1330 = vadd.f32 %v776, %v1186
      %v1331 = vadd.f32 %v777, %v1187
      %v1332 = vadd.f32 %v778, %v1188
      %v1333 = vadd.f32 %v779, %v1189
      %v1334 = vadd.f32 %v780, %v1190
      %v1335 = vadd.f32 %v781, %v1191
      %v1336 = vadd.f32 %v782, %v1192
      %v1337 = vadd.f32 %v783, %v1193
      %v1338 = vadd.f32 %v784, %v1194
      %v1339 = vadd.f32 %v785, %v1195
      %v1340 = vadd.f32 %v786, %v1196
      %v1341 = vadd.f32 %v787, %v1197
      %v1342 = vadd.f32 %v788, %v1198
      %v1343 = vadd.f32 %v789, %v1199
      %v1344 = vadd.f32 %v790, %v1200
      %v1345 = vadd.f32 %v791, %v1201
      %v1346 = vadd.f32 %v792, %v1202
      %v1347 = vadd.f32 %v793, %v1203
      %v1348 = vadd.f32 %v794, %v1204
      %v1349 = vadd.f32 %v795, %v1205
      %v1350 = vadd.f32 %v796, %v1206
      %v1351 = vadd.f32 %v797, %v1207
      %v1352 = vadd.f32 %v798, %v1208
      %v1353 = vadd.f32 %v799, %v1209
      %v1354 = vadd.f32 %v800, %v1210
      %v1355 = vadd.f32 %v801, %v1211
      %v1356 = vadd.f32 %v802, %v1212
      %v1357 = vadd.f32 %v803, %v1213
      %v1358 = vadd.f32 %v804, %v1214
      %v1359 = vadd.f32 %v805, %v1215
      %v1360 = vadd.f32 %v806, %v1216
      %v1361 = vadd.f32 %v807, %v1217
      %v1362 = vadd.f32 %v808, %v1218
      %v1363 = vadd.f32 %v809, %v1219
      %v1364 = vadd.f32 %v810, %v1220
      %v1365 = vadd.f32 %v811, %v1221
      %v1366 = vadd.f32 %v812, %v1222
      %v1367 = vadd.f32 %v813, %v1223
      %v1368 = vadd.f32 %v814, %v1224
      %v1369 = vadd.f32 %v815, %v1225
      %v1370 = vadd.f32 %v816, %v1226
      %v1371 = vadd.f32 %v817, %v1227
      %v1372 = vadd.f32 %v818, %v1228
      %v1373 = vadd.f32 %v819, %v1229
      %v1374 = vadd.f32 %v820, %v1230
      %v1375 = vadd.f32 %v821, %v1231
      %v1376 = vadd.f32 %v822, %v1232
      %v1377 = vadd.f32 %v823, %v1233
      %v1378 = vadd.f32 %v824, %v1234
      %v1379 = vadd.f32 %v825, %v1235
      %v1380 = vadd.f32 %v826, %v1236
      %v1381 = vadd.f32 %v827, %v1237
      %v1382 = vadd.f32 %v828, %v1238
      %v1383 = vadd.f32 %v829, %v1239
      %v1384 = vadd.f32 %v830, %v1240
      %v1385 = vadd.f32 %v831, %v1241
      %v1386 = vadd.f32 %v832, %v1242
      %v1387 = vadd.f32 %v833, %v1243
      %v1388 = vadd.f32 %v834, %v1244
      %v1389 = vadd.f32 %v835, %v1245
      %v1390 = vadd.f32 %v836, %v1246
      %v1391 = vadd.f32 %v837, %v1247
      %v1392 = vadd.f32 %v838, %v1248
      %v1393 = vadd.f32 %v839, %v1249
      %v1394 = vadd.f32 %v840, %v1250
      %v1395 = vadd.f32 %v841, %v1251
      %v1396 = vadd.f32 %v842, %v1252
      %v1397 = vadd.f32 %v843, %v1253
      %v1398 = vadd.f32 %v844, %v1254
      %v1399 = vadd.f32 %v845, %v1255
      %v1400 = vadd.f32 %v846, %v1256
      %v1401 = vadd.f32 %v847, %v1257
      %v1402 = vadd.f32 %v848, %v1258
      %v1403 = vadd.f32 %v849, %v1259
      %v1404 = vadd.f32 %v850, %v1260
      %v1405 = vadd.f32 %v851, %v1261
      %v1406 = vadd.f32 %v852, %v1262
      %v1407 = vadd.f32 %v853, %v1263
      %v1408 = vadd.f32 %v854, %v1264
      %v1409 = vadd.f32 %v855, %v1265
      %v1410 = vadd.f32 %v856, %v1266
      %v1411 = vadd.f32 %v857, %v1267
      %v1412 = vadd.f32 %v858, %v1268
      %v1413 = vadd.f32 %v859, %v1269
      %v1414 = vadd.f32 %v860, %v1270
      %v1415 = vadd.f32 %v861, %v1271
      %v1416 = vadd.f32 %v862, %v1272
      %v1417 = vadd.f32 %v863, %v1273
      %v1418 = vadd.f32 %v864, %v1274
      %v1419 = vadd.f32 %v865, %v1275
      %v1420 = vadd.f32 %v866, %v1276
      %v1421 = vadd.f32 %v867, %v1277
      %v1422 = vadd.f32 %v868, %v1278
      %v1423 = vadd.f32 %v869, %v1279
      %v1424 = vadd.f32 %v870, %v1280
      %v1425 = vadd.f32 %v871, %v1281
      %v1426 = vadd.f32 %v872, %v1282
      %v1427 = vadd.f32 %v873, %v1283
      %v1428 = vadd.f32 %v874, %v1284
      %v1429 = vadd.f32 %v875, %v1285
      %v1430 = vadd.f32 %v876, %v1286
      %v1431 = vadd.f32 %v877, %v1287
      %v1432 = vadd.f32 %v878, %v1288
      %v1433 = vadd.f32 %v879, %v1289
      %v1434 = vadd.f32 %v880, %v1290
      %v1435 = vadd.f32 %v881, %v1291
      %v1436 = vadd.f32 %v882, %v1292
      %v1437 = vadd.f32 %v883, %v1293
      %v1438 = vadd.f32 %v884, %v1294
      %v1439 = vadd.f32 %v885, %v1295
      %v1440 = vadd.f32 %v886, %v1296
      %v1441 = vadd.f32 %v887, %v1297
      %v1442 = vadd.f32 %v888, %v1298
      %v1443 = vadd.f32 %v889, %v1299
      %v1444 = vadd.f32 %v890, %v1300
      %1445 = vset.pattern.permute.xlu0 2
      %1446 = vperm.xlu0 %1445, %v320
      %v1447 = vpop.permute.xlu0 %1446
      %1449 = vset.pattern.permute.xlu0 2
      %1450 = vperm.xlu0 %1449, %v321
      %v1451 = vpop.permute.xlu0 %1450
      %1453 = vset.pattern.permute.xlu0 2
      %1454 = vperm.xlu0 %1453, %v322
      %v1455 = vpop.permute.xlu0 %1454
      %1457 = vset.pattern.permute.xlu0 2
      %1458 = vperm.xlu0 %1457, %v323
      %v1459 = vpop.permute.xlu0 %1458
      %1461 = vset.pattern.permute.xlu0 2
      %1462 = vperm.xlu0 %1461, %v324
      %v1463 = vpop.permute.xlu0 %1462
      %1465 = vset.pattern.permute.xlu0 2
      %1466 = vperm.xlu0 %1465, %v325
      %v1467 = vpop.permute.xlu0 %1466
      %1469 = vset.pattern.permute.xlu0 2
      %1470 = vperm.xlu0 %1469, %v326
      %v1471 = vpop.permute.xlu0 %1470
      %1473 = vset.pattern.permute.xlu0 2
      %1474 = vperm.xlu0 %1473, %v327
      %v1475 = vpop.permute.xlu0 %1474
      %1477 = vset.pattern.permute.xlu0 2
      %1478 = vperm.xlu0 %1477, %v328
      %v1479 = vpop.permute.xlu0 %1478
      %s1481 = scalar_lea.vmem %s163, 2
      %v1482 = vld [vmem:[%s1481] ss:$4 sm:$0xff]
      %s1483 = scalar_lea.vmem %s163, 34
      %v1484 = vld [vmem:[%s1483] ss:$4 sm:$0xff]
      %v1487 = vlaneseq
      %v1488 = vshrl.u32 %v1487, 7
      %v1489 = vsub.s32 0, %v1488
      %v1490 = vrot.slane %v1482, %v1489
      %v1491 = vlaneseq
      %v1492 = vshrl.u32 %v1491, 7
      %v1493 = vsub.s32 1, %v1492
      %v1494 = vrot.slane %v1482, %v1493
      %v1495 = vlaneseq
      %v1496 = vshrl.u32 %v1495, 7
      %v1497 = vsub.s32 2, %v1496
      %v1498 = vrot.slane %v1482, %v1497
      %v1499 = vlaneseq
      %v1500 = vshrl.u32 %v1499, 7
      %v1501 = vsub.s32 3, %v1500
      %v1502 = vrot.slane %v1482, %v1501
      %v1503 = vlaneseq
      %v1504 = vshrl.u32 %v1503, 7
      %v1505 = vsub.s32 4, %v1504
      %v1506 = vrot.slane %v1482, %v1505
      %v1507 = vlaneseq
      %v1508 = vshrl.u32 %v1507, 7
      %v1509 = vsub.s32 5, %v1508
      %v1510 = vrot.slane %v1482, %v1509
      %v1511 = vlaneseq
      %v1512 = vshrl.u32 %v1511, 7
      %v1513 = vsub.s32 6, %v1512
      %v1514 = vrot.slane %v1482, %v1513
      %v1515 = vlaneseq
      %v1516 = vshrl.u32 %v1515, 7
      %v1517 = vsub.s32 7, %v1516
      %v1518 = vrot.slane %v1482, %v1517
      %v1519 = vlaneseq
      %v1520 = vshrl.u32 %v1519, 7
      %v1521 = vsub.s32 0, %v1520
      %v1522 = vrot.slane %v1484, %v1521
      %v1523 = vlaneseq
      %v1524 = vshrl.u32 %v1523, 7
      %v1525 = vsub.s32 1, %v1524
      %v1526 = vrot.slane %v1484, %v1525
      %v1527 = vlaneseq
      %v1528 = vshrl.u32 %v1527, 7
      %v1529 = vsub.s32 2, %v1528
      %v1530 = vrot.slane %v1484, %v1529
      %v1531 = vlaneseq
      %v1532 = vshrl.u32 %v1531, 7
      %v1533 = vsub.s32 3, %v1532
      %v1534 = vrot.slane %v1484, %v1533
      %v1535 = vlaneseq
      %v1536 = vshrl.u32 %v1535, 7
      %v1537 = vsub.s32 4, %v1536
      %v1538 = vrot.slane %v1484, %v1537
      %v1539 = vlaneseq
      %v1540 = vshrl.u32 %v1539, 7
      %v1541 = vsub.s32 5, %v1540
      %v1542 = vrot.slane %v1484, %v1541
      %v1543 = vlaneseq
      %v1544 = vshrl.u32 %v1543, 7
      %v1545 = vsub.s32 6, %v1544
      %v1546 = vrot.slane %v1484, %v1545
      %v1547 = vlaneseq
      %v1548 = vshrl.u32 %v1547, 7
      %v1549 = vsub.s32 7, %v1548
      %v1550 = vrot.slane %v1484, %v1549
      %v1567 = vsub.f32 %v1447, %v1490
      %v1568 = vsub.f32 %v1447, %v1494
      %v1569 = vsub.f32 %v1447, %v1498
      %v1570 = vsub.f32 %v1447, %v1502
      %v1571 = vsub.f32 %v1447, %v1506
      %v1572 = vsub.f32 %v1447, %v1510
      %v1573 = vsub.f32 %v1447, %v1514
      %v1574 = vsub.f32 %v1447, %v1518
      %v1575 = vsub.f32 %v1447, %v1522
      %v1576 = vsub.f32 %v1447, %v1526
      %v1577 = vsub.f32 %v1447, %v1530
      %v1578 = vsub.f32 %v1447, %v1534
      %v1579 = vsub.f32 %v1447, %v1538
      %v1580 = vsub.f32 %v1447, %v1542
      %v1581 = vsub.f32 %v1447, %v1546
      %v1582 = vsub.f32 %v1447, %v1550
      %v1583 = vsub.f32 %v1451, %v1490
      %v1584 = vsub.f32 %v1451, %v1494
      %v1585 = vsub.f32 %v1451, %v1498
      %v1586 = vsub.f32 %v1451, %v1502
      %v1587 = vsub.f32 %v1451, %v1506
      %v1588 = vsub.f32 %v1451, %v1510
      %v1589 = vsub.f32 %v1451, %v1514
      %v1590 = vsub.f32 %v1451, %v1518
      %v1591 = vsub.f32 %v1451, %v1522
      %v1592 = vsub.f32 %v1451, %v1526
      %v1593 = vsub.f32 %v1451, %v1530
      %v1594 = vsub.f32 %v1451, %v1534
      %v1595 = vsub.f32 %v1451, %v1538
      %v1596 = vsub.f32 %v1451, %v1542
      %v1597 = vsub.f32 %v1451, %v1546
      %v1598 = vsub.f32 %v1451, %v1550
      %v1599 = vsub.f32 %v1455, %v1490
      %v1600 = vsub.f32 %v1455, %v1494
      %v1601 = vsub.f32 %v1455, %v1498
      %v1602 = vsub.f32 %v1455, %v1502
      %v1603 = vsub.f32 %v1455, %v1506
      %v1604 = vsub.f32 %v1455, %v1510
      %v1605 = vsub.f32 %v1455, %v1514
      %v1606 = vsub.f32 %v1455, %v1518
      %v1607 = vsub.f32 %v1455, %v1522
      %v1608 = vsub.f32 %v1455, %v1526
      %v1609 = vsub.f32 %v1455, %v1530
      %v1610 = vsub.f32 %v1455, %v1534
      %v1611 = vsub.f32 %v1455, %v1538
      %v1612 = vsub.f32 %v1455, %v1542
      %v1613 = vsub.f32 %v1455, %v1546
      %v1614 = vsub.f32 %v1455, %v1550
      %v1615 = vsub.f32 %v1459, %v1490
      %v1616 = vsub.f32 %v1459, %v1494
      %v1617 = vsub.f32 %v1459, %v1498
      %v1618 = vsub.f32 %v1459, %v1502
      %v1619 = vsub.f32 %v1459, %v1506
      %v1620 = vsub.f32 %v1459, %v1510
      %v1621 = vsub.f32 %v1459, %v1514
      %v1622 = vsub.f32 %v1459, %v1518
      %v1623 = vsub.f32 %v1459, %v1522
      %v1624 = vsub.f32 %v1459, %v1526
      %v1625 = vsub.f32 %v1459, %v1530
      %v1626 = vsub.f32 %v1459, %v1534
      %v1627 = vsub.f32 %v1459, %v1538
      %v1628 = vsub.f32 %v1459, %v1542
      %v1629 = vsub.f32 %v1459, %v1546
      %v1630 = vsub.f32 %v1459, %v1550
      %v1631 = vsub.f32 %v1463, %v1490
      %v1632 = vsub.f32 %v1463, %v1494
      %v1633 = vsub.f32 %v1463, %v1498
      %v1634 = vsub.f32 %v1463, %v1502
      %v1635 = vsub.f32 %v1463, %v1506
      %v1636 = vsub.f32 %v1463, %v1510
      %v1637 = vsub.f32 %v1463, %v1514
      %v1638 = vsub.f32 %v1463, %v1518
      %v1639 = vsub.f32 %v1463, %v1522
      %v1640 = vsub.f32 %v1463, %v1526
      %v1641 = vsub.f32 %v1463, %v1530
      %v1642 = vsub.f32 %v1463, %v1534
      %v1643 = vsub.f32 %v1463, %v1538
      %v1644 = vsub.f32 %v1463, %v1542
      %v1645 = vsub.f32 %v1463, %v1546
      %v1646 = vsub.f32 %v1463, %v1550
      %v1647 = vsub.f32 %v1467, %v1490
      %v1648 = vsub.f32 %v1467, %v1494
      %v1649 = vsub.f32 %v1467, %v1498
      %v1650 = vsub.f32 %v1467, %v1502
      %v1651 = vsub.f32 %v1467, %v1506
      %v1652 = vsub.f32 %v1467, %v1510
      %v1653 = vsub.f32 %v1467, %v1514
      %v1654 = vsub.f32 %v1467, %v1518
      %v1655 = vsub.f32 %v1467, %v1522
      %v1656 = vsub.f32 %v1467, %v1526
      %v1657 = vsub.f32 %v1467, %v1530
      %v1658 = vsub.f32 %v1467, %v1534
      %v1659 = vsub.f32 %v1467, %v1538
      %v1660 = vsub.f32 %v1467, %v1542
      %v1661 = vsub.f32 %v1467, %v1546
      %v1662 = vsub.f32 %v1467, %v1550
      %v1663 = vsub.f32 %v1471, %v1490
      %v1664 = vsub.f32 %v1471, %v1494
      %v1665 = vsub.f32 %v1471, %v1498
      %v1666 = vsub.f32 %v1471, %v1502
      %v1667 = vsub.f32 %v1471, %v1506
      %v1668 = vsub.f32 %v1471, %v1510
      %v1669 = vsub.f32 %v1471, %v1514
      %v1670 = vsub.f32 %v1471, %v1518
      %v1671 = vsub.f32 %v1471, %v1522
      %v1672 = vsub.f32 %v1471, %v1526
      %v1673 = vsub.f32 %v1471, %v1530
      %v1674 = vsub.f32 %v1471, %v1534
      %v1675 = vsub.f32 %v1471, %v1538
      %v1676 = vsub.f32 %v1471, %v1542
      %v1677 = vsub.f32 %v1471, %v1546
      %v1678 = vsub.f32 %v1471, %v1550
      %v1679 = vsub.f32 %v1475, %v1490
      %v1680 = vsub.f32 %v1475, %v1494
      %v1681 = vsub.f32 %v1475, %v1498
      %v1682 = vsub.f32 %v1475, %v1502
      %v1683 = vsub.f32 %v1475, %v1506
      %v1684 = vsub.f32 %v1475, %v1510
      %v1685 = vsub.f32 %v1475, %v1514
      %v1686 = vsub.f32 %v1475, %v1518
      %v1687 = vsub.f32 %v1475, %v1522
      %v1688 = vsub.f32 %v1475, %v1526
      %v1689 = vsub.f32 %v1475, %v1530
      %v1690 = vsub.f32 %v1475, %v1534
      %v1691 = vsub.f32 %v1475, %v1538
      %v1692 = vsub.f32 %v1475, %v1542
      %v1693 = vsub.f32 %v1475, %v1546
      %v1694 = vsub.f32 %v1475, %v1550
      %v1695 = vsub.f32 %v1479, %v1490
      %v1696 = vsub.f32 %v1479, %v1494
      %v1697 = vsub.f32 %v1479, %v1498
      %v1698 = vsub.f32 %v1479, %v1502
      %v1699 = vsub.f32 %v1479, %v1506
      %v1700 = vsub.f32 %v1479, %v1510
      %v1701 = vsub.f32 %v1479, %v1514
      %v1702 = vsub.f32 %v1479, %v1518
      %v1703 = vsub.f32 %v1479, %v1522
      %v1704 = vsub.f32 %v1479, %v1526
      %v1705 = vsub.f32 %v1479, %v1530
      %v1706 = vsub.f32 %v1479, %v1534
      %v1707 = vsub.f32 %v1479, %v1538
      %v1708 = vsub.f32 %v1479, %v1542
      %v1709 = vsub.f32 %v1479, %v1546
      %v1710 = vsub.f32 %v1479, %v1550
      %v1711 = vmul.f32 %v1567, %v1567
      %v1712 = vmul.f32 %v1568, %v1568
      %v1713 = vmul.f32 %v1569, %v1569
      %v1714 = vmul.f32 %v1570, %v1570
      %v1715 = vmul.f32 %v1571, %v1571
      %v1716 = vmul.f32 %v1572, %v1572
      %v1717 = vmul.f32 %v1573, %v1573
      %v1718 = vmul.f32 %v1574, %v1574
      %v1719 = vmul.f32 %v1575, %v1575
      %v1720 = vmul.f32 %v1576, %v1576
      %v1721 = vmul.f32 %v1577, %v1577
      %v1722 = vmul.f32 %v1578, %v1578
      %v1723 = vmul.f32 %v1579, %v1579
      %v1724 = vmul.f32 %v1580, %v1580
      %v1725 = vmul.f32 %v1581, %v1581
      %v1726 = vmul.f32 %v1582, %v1582
      %v1727 = vmul.f32 %v1583, %v1583
      %v1728 = vmul.f32 %v1584, %v1584
      %v1729 = vmul.f32 %v1585, %v1585
      %v1730 = vmul.f32 %v1586, %v1586
      %v1731 = vmul.f32 %v1587, %v1587
      %v1732 = vmul.f32 %v1588, %v1588
      %v1733 = vmul.f32 %v1589, %v1589
      %v1734 = vmul.f32 %v1590, %v1590
      %v1735 = vmul.f32 %v1591, %v1591
      %v1736 = vmul.f32 %v1592, %v1592
      %v1737 = vmul.f32 %v1593, %v1593
      %v1738 = vmul.f32 %v1594, %v1594
      %v1739 = vmul.f32 %v1595, %v1595
      %v1740 = vmul.f32 %v1596, %v1596
      %v1741 = vmul.f32 %v1597, %v1597
      %v1742 = vmul.f32 %v1598, %v1598
      %v1743 = vmul.f32 %v1599, %v1599
      %v1744 = vmul.f32 %v1600, %v1600
      %v1745 = vmul.f32 %v1601, %v1601
      %v1746 = vmul.f32 %v1602, %v1602
      %v1747 = vmul.f32 %v1603, %v1603
      %v1748 = vmul.f32 %v1604, %v1604
      %v1749 = vmul.f32 %v1605, %v1605
      %v1750 = vmul.f32 %v1606, %v1606
      %v1751 = vmul.f32 %v1607, %v1607
      %v1752 = vmul.f32 %v1608, %v1608
      %v1753 = vmul.f32 %v1609, %v1609
      %v1754 = vmul.f32 %v1610, %v1610
      %v1755 = vmul.f32 %v1611, %v1611
      %v1756 = vmul.f32 %v1612, %v1612
      %v1757 = vmul.f32 %v1613, %v1613
      %v1758 = vmul.f32 %v1614, %v1614
      %v1759 = vmul.f32 %v1615, %v1615
      %v1760 = vmul.f32 %v1616, %v1616
      %v1761 = vmul.f32 %v1617, %v1617
      %v1762 = vmul.f32 %v1618, %v1618
      %v1763 = vmul.f32 %v1619, %v1619
      %v1764 = vmul.f32 %v1620, %v1620
      %v1765 = vmul.f32 %v1621, %v1621
      %v1766 = vmul.f32 %v1622, %v1622
      %v1767 = vmul.f32 %v1623, %v1623
      %v1768 = vmul.f32 %v1624, %v1624
      %v1769 = vmul.f32 %v1625, %v1625
      %v1770 = vmul.f32 %v1626, %v1626
      %v1771 = vmul.f32 %v1627, %v1627
      %v1772 = vmul.f32 %v1628, %v1628
      %v1773 = vmul.f32 %v1629, %v1629
      %v1774 = vmul.f32 %v1630, %v1630
      %v1775 = vmul.f32 %v1631, %v1631
      %v1776 = vmul.f32 %v1632, %v1632
      %v1777 = vmul.f32 %v1633, %v1633
      %v1778 = vmul.f32 %v1634, %v1634
      %v1779 = vmul.f32 %v1635, %v1635
      %v1780 = vmul.f32 %v1636, %v1636
      %v1781 = vmul.f32 %v1637, %v1637
      %v1782 = vmul.f32 %v1638, %v1638
      %v1783 = vmul.f32 %v1639, %v1639
      %v1784 = vmul.f32 %v1640, %v1640
      %v1785 = vmul.f32 %v1641, %v1641
      %v1786 = vmul.f32 %v1642, %v1642
      %v1787 = vmul.f32 %v1643, %v1643
      %v1788 = vmul.f32 %v1644, %v1644
      %v1789 = vmul.f32 %v1645, %v1645
      %v1790 = vmul.f32 %v1646, %v1646
      %v1791 = vmul.f32 %v1647, %v1647
      %v1792 = vmul.f32 %v1648, %v1648
      %v1793 = vmul.f32 %v1649, %v1649
      %v1794 = vmul.f32 %v1650, %v1650
      %v1795 = vmul.f32 %v1651, %v1651
      %v1796 = vmul.f32 %v1652, %v1652
      %v1797 = vmul.f32 %v1653, %v1653
      %v1798 = vmul.f32 %v1654, %v1654
      %v1799 = vmul.f32 %v1655, %v1655
      %v1800 = vmul.f32 %v1656, %v1656
      %v1801 = vmul.f32 %v1657, %v1657
      %v1802 = vmul.f32 %v1658, %v1658
      %v1803 = vmul.f32 %v1659, %v1659
      %v1804 = vmul.f32 %v1660, %v1660
      %v1805 = vmul.f32 %v1661, %v1661
      %v1806 = vmul.f32 %v1662, %v1662
      %v1807 = vmul.f32 %v1663, %v1663
      %v1808 = vmul.f32 %v1664, %v1664
      %v1809 = vmul.f32 %v1665, %v1665
      %v1810 = vmul.f32 %v1666, %v1666
      %v1811 = vmul.f32 %v1667, %v1667
      %v1812 = vmul.f32 %v1668, %v1668
      %v1813 = vmul.f32 %v1669, %v1669
      %v1814 = vmul.f32 %v1670, %v1670
      %v1815 = vmul.f32 %v1671, %v1671
      %v1816 = vmul.f32 %v1672, %v1672
      %v1817 = vmul.f32 %v1673, %v1673
      %v1818 = vmul.f32 %v1674, %v1674
      %v1819 = vmul.f32 %v1675, %v1675
      %v1820 = vmul.f32 %v1676, %v1676
      %v1821 = vmul.f32 %v1677, %v1677
      %v1822 = vmul.f32 %v1678, %v1678
      %v1823 = vmul.f32 %v1679, %v1679
      %v1824 = vmul.f32 %v1680, %v1680
      %v1825 = vmul.f32 %v1681, %v1681
      %v1826 = vmul.f32 %v1682, %v1682
      %v1827 = vmul.f32 %v1683, %v1683
      %v1828 = vmul.f32 %v1684, %v1684
      %v1829 = vmul.f32 %v1685, %v1685
      %v1830 = vmul.f32 %v1686, %v1686
      %v1831 = vmul.f32 %v1687, %v1687
      %v1832 = vmul.f32 %v1688, %v1688
      %v1833 = vmul.f32 %v1689, %v1689
      %v1834 = vmul.f32 %v1690, %v1690
      %v1835 = vmul.f32 %v1691, %v1691
      %v1836 = vmul.f32 %v1692, %v1692
      %v1837 = vmul.f32 %v1693, %v1693
      %v1838 = vmul.f32 %v1694, %v1694
      %v1839 = vmul.f32 %v1695, %v1695
      %v1840 = vmul.f32 %v1696, %v1696
      %v1841 = vmul.f32 %v1697, %v1697
      %v1842 = vmul.f32 %v1698, %v1698
      %v1843 = vmul.f32 %v1699, %v1699
      %v1844 = vmul.f32 %v1700, %v1700
      %v1845 = vmul.f32 %v1701, %v1701
      %v1846 = vmul.f32 %v1702, %v1702
      %v1847 = vmul.f32 %v1703, %v1703
      %v1848 = vmul.f32 %v1704, %v1704
      %v1849 = vmul.f32 %v1705, %v1705
      %v1850 = vmul.f32 %v1706, %v1706
      %v1851 = vmul.f32 %v1707, %v1707
      %v1852 = vmul.f32 %v1708, %v1708
      %v1853 = vmul.f32 %v1709, %v1709
      %v1854 = vmul.f32 %v1710, %v1710
      %v1855 = vadd.f32 %v1301, %v1711
      %v1856 = vadd.f32 %v1302, %v1712
      %v1857 = vadd.f32 %v1303, %v1713
      %v1858 = vadd.f32 %v1304, %v1714
      %v1859 = vadd.f32 %v1305, %v1715
      %v1860 = vadd.f32 %v1306, %v1716
      %v1861 = vadd.f32 %v1307, %v1717
      %v1862 = vadd.f32 %v1308, %v1718
      %v1863 = vadd.f32 %v1309, %v1719
      %v1864 = vadd.f32 %v1310, %v1720
      %v1865 = vadd.f32 %v1311, %v1721
      %v1866 = vadd.f32 %v1312, %v1722
      %v1867 = vadd.f32 %v1313, %v1723
      %v1868 = vadd.f32 %v1314, %v1724
      %v1869 = vadd.f32 %v1315, %v1725
      %v1870 = vadd.f32 %v1316, %v1726
      %v1871 = vadd.f32 %v1317, %v1727
      %v1872 = vadd.f32 %v1318, %v1728
      %v1873 = vadd.f32 %v1319, %v1729
      %v1874 = vadd.f32 %v1320, %v1730
      %v1875 = vadd.f32 %v1321, %v1731
      %v1876 = vadd.f32 %v1322, %v1732
      %v1877 = vadd.f32 %v1323, %v1733
      %v1878 = vadd.f32 %v1324, %v1734
      %v1879 = vadd.f32 %v1325, %v1735
      %v1880 = vadd.f32 %v1326, %v1736
      %v1881 = vadd.f32 %v1327, %v1737
      %v1882 = vadd.f32 %v1328, %v1738
      %v1883 = vadd.f32 %v1329, %v1739
      %v1884 = vadd.f32 %v1330, %v1740
      %v1885 = vadd.f32 %v1331, %v1741
      %v1886 = vadd.f32 %v1332, %v1742
      %v1887 = vadd.f32 %v1333, %v1743
      %v1888 = vadd.f32 %v1334, %v1744
      %v1889 = vadd.f32 %v1335, %v1745
      %v1890 = vadd.f32 %v1336, %v1746
      %v1891 = vadd.f32 %v1337, %v1747
      %v1892 = vadd.f32 %v1338, %v1748
      %v1893 = vadd.f32 %v1339, %v1749
      %v1894 = vadd.f32 %v1340, %v1750
      %v1895 = vadd.f32 %v1341, %v1751
      %v1896 = vadd.f32 %v1342, %v1752
      %v1897 = vadd.f32 %v1343, %v1753
      %v1898 = vadd.f32 %v1344, %v1754
      %v1899 = vadd.f32 %v1345, %v1755
      %v1900 = vadd.f32 %v1346, %v1756
      %v1901 = vadd.f32 %v1347, %v1757
      %v1902 = vadd.f32 %v1348, %v1758
      %v1903 = vadd.f32 %v1349, %v1759
      %v1904 = vadd.f32 %v1350, %v1760
      %v1905 = vadd.f32 %v1351, %v1761
      %v1906 = vadd.f32 %v1352, %v1762
      %v1907 = vadd.f32 %v1353, %v1763
      %v1908 = vadd.f32 %v1354, %v1764
      %v1909 = vadd.f32 %v1355, %v1765
      %v1910 = vadd.f32 %v1356, %v1766
      %v1911 = vadd.f32 %v1357, %v1767
      %v1912 = vadd.f32 %v1358, %v1768
      %v1913 = vadd.f32 %v1359, %v1769
      %v1914 = vadd.f32 %v1360, %v1770
      %v1915 = vadd.f32 %v1361, %v1771
      %v1916 = vadd.f32 %v1362, %v1772
      %v1917 = vadd.f32 %v1363, %v1773
      %v1918 = vadd.f32 %v1364, %v1774
      %v1919 = vadd.f32 %v1365, %v1775
      %v1920 = vadd.f32 %v1366, %v1776
      %v1921 = vadd.f32 %v1367, %v1777
      %v1922 = vadd.f32 %v1368, %v1778
      %v1923 = vadd.f32 %v1369, %v1779
      %v1924 = vadd.f32 %v1370, %v1780
      %v1925 = vadd.f32 %v1371, %v1781
      %v1926 = vadd.f32 %v1372, %v1782
      %v1927 = vadd.f32 %v1373, %v1783
      %v1928 = vadd.f32 %v1374, %v1784
      %v1929 = vadd.f32 %v1375, %v1785
      %v1930 = vadd.f32 %v1376, %v1786
      %v1931 = vadd.f32 %v1377, %v1787
      %v1932 = vadd.f32 %v1378, %v1788
      %v1933 = vadd.f32 %v1379, %v1789
      %v1934 = vadd.f32 %v1380, %v1790
      %v1935 = vadd.f32 %v1381, %v1791
      %v1936 = vadd.f32 %v1382, %v1792
      %v1937 = vadd.f32 %v1383, %v1793
      %v1938 = vadd.f32 %v1384, %v1794
      %v1939 = vadd.f32 %v1385, %v1795
      %v1940 = vadd.f32 %v1386, %v1796
      %v1941 = vadd.f32 %v1387, %v1797
      %v1942 = vadd.f32 %v1388, %v1798
      %v1943 = vadd.f32 %v1389, %v1799
      %v1944 = vadd.f32 %v1390, %v1800
      %v1945 = vadd.f32 %v1391, %v1801
      %v1946 = vadd.f32 %v1392, %v1802
      %v1947 = vadd.f32 %v1393, %v1803
      %v1948 = vadd.f32 %v1394, %v1804
      %v1949 = vadd.f32 %v1395, %v1805
      %v1950 = vadd.f32 %v1396, %v1806
      %v1951 = vadd.f32 %v1397, %v1807
      %v1952 = vadd.f32 %v1398, %v1808
      %v1953 = vadd.f32 %v1399, %v1809
      %v1954 = vadd.f32 %v1400, %v1810
      %v1955 = vadd.f32 %v1401, %v1811
      %v1956 = vadd.f32 %v1402, %v1812
      %v1957 = vadd.f32 %v1403, %v1813
      %v1958 = vadd.f32 %v1404, %v1814
      %v1959 = vadd.f32 %v1405, %v1815
      %v1960 = vadd.f32 %v1406, %v1816
      %v1961 = vadd.f32 %v1407, %v1817
      %v1962 = vadd.f32 %v1408, %v1818
      %v1963 = vadd.f32 %v1409, %v1819
      %v1964 = vadd.f32 %v1410, %v1820
      %v1965 = vadd.f32 %v1411, %v1821
      %v1966 = vadd.f32 %v1412, %v1822
      %v1967 = vadd.f32 %v1413, %v1823
      %v1968 = vadd.f32 %v1414, %v1824
      %v1969 = vadd.f32 %v1415, %v1825
      %v1970 = vadd.f32 %v1416, %v1826
      %v1971 = vadd.f32 %v1417, %v1827
      %v1972 = vadd.f32 %v1418, %v1828
      %v1973 = vadd.f32 %v1419, %v1829
      %v1974 = vadd.f32 %v1420, %v1830
      %v1975 = vadd.f32 %v1421, %v1831
      %v1976 = vadd.f32 %v1422, %v1832
      %v1977 = vadd.f32 %v1423, %v1833
      %v1978 = vadd.f32 %v1424, %v1834
      %v1979 = vadd.f32 %v1425, %v1835
      %v1980 = vadd.f32 %v1426, %v1836
      %v1981 = vadd.f32 %v1427, %v1837
      %v1982 = vadd.f32 %v1428, %v1838
      %v1983 = vadd.f32 %v1429, %v1839
      %v1984 = vadd.f32 %v1430, %v1840
      %v1985 = vadd.f32 %v1431, %v1841
      %v1986 = vadd.f32 %v1432, %v1842
      %v1987 = vadd.f32 %v1433, %v1843
      %v1988 = vadd.f32 %v1434, %v1844
      %v1989 = vadd.f32 %v1435, %v1845
      %v1990 = vadd.f32 %v1436, %v1846
      %v1991 = vadd.f32 %v1437, %v1847
      %v1992 = vadd.f32 %v1438, %v1848
      %v1993 = vadd.f32 %v1439, %v1849
      %v1994 = vadd.f32 %v1440, %v1850
      %v1995 = vadd.f32 %v1441, %v1851
      %v1996 = vadd.f32 %v1442, %v1852
      %v1997 = vadd.f32 %v1443, %v1853
      %v1998 = vadd.f32 %v1444, %v1854
      %v1999 = vld [vmem:[#allocation2] sm:$0xff]
      %v2000 = vld [vmem:[#allocation2 + $0x8] sm:$0xff]
      %v2001 = vld [vmem:[#allocation2 + $0x10] sm:$0xff]
      %v2002 = vld [vmem:[#allocation2 + $0x18] sm:$0xff]
      %v2003 = vld [vmem:[#allocation2 + $0x20] sm:$0xff]
      %v2004 = vld [vmem:[#allocation2 + $0x28] sm:$0xff]
      %v2005 = vld [vmem:[#allocation2 + $0x30] sm:$0xff]
      %v2006 = vld [vmem:[#allocation2 + $0x38] sm:$0xff]
      %v2007 = vld [vmem:[#allocation2 + $0x40] sm:$0xff]
      %v2008 = vld [vmem:[#allocation2 + $0x48] sm:$0xff]
      %v2009 = vld [vmem:[#allocation2 + $0x50] sm:$0xff]
      %v2010 = vld [vmem:[#allocation2 + $0x58] sm:$0xff]
      %v2011 = vld [vmem:[#allocation2 + $0x60] sm:$0xff]
      %v2012 = vld [vmem:[#allocation2 + $0x68] sm:$0xff]
      %v2013 = vld [vmem:[#allocation2 + $0x70] sm:$0xff]
      %v2014 = vld [vmem:[#allocation2 + $0x78] sm:$0xff]
      %v2015 = vld [vmem:[#allocation2 + $0x80] sm:$0xff]
      %v2016 = vld [vmem:[#allocation2 + $0x88] sm:$0xff]
      %v2017 = vld [vmem:[#allocation2 + $0x90] sm:$0xff]
      %v2018 = vld [vmem:[#allocation2 + $0x98] sm:$0xff]
      %v2019 = vld [vmem:[#allocation2 + $0xa0] sm:$0xff]
      %v2020 = vld [vmem:[#allocation2 + $0xa8] sm:$0xff]
      %v2021 = vld [vmem:[#allocation2 + $0xb0] sm:$0xff]
      %v2022 = vld [vmem:[#allocation2 + $0xb8] sm:$0xff]
      %v2023 = vld [vmem:[#allocation2 + $0xc0] sm:$0xff]
      %v2024 = vld [vmem:[#allocation2 + $0xc8] sm:$0xff]
      %v2025 = vld [vmem:[#allocation2 + $0xd0] sm:$0xff]
      %v2026 = vld [vmem:[#allocation2 + $0xd8] sm:$0xff]
      %v2027 = vld [vmem:[#allocation2 + $0xe0] sm:$0xff]
      %v2028 = vld [vmem:[#allocation2 + $0xe8] sm:$0xff]
      %v2029 = vld [vmem:[#allocation2 + $0xf0] sm:$0xff]
      %v2030 = vld [vmem:[#allocation2 + $0xf8] sm:$0xff]
      %v2031 = vld [vmem:[#allocation2 + $0x100] sm:$0xff]
      %v2032 = vld [vmem:[#allocation2 + $0x108] sm:$0xff]
      %v2033 = vld [vmem:[#allocation2 + $0x110] sm:$0xff]
      %v2034 = vld [vmem:[#allocation2 + $0x118] sm:$0xff]
      %v2035 = vld [vmem:[#allocation2 + $0x120] sm:$0xff]
      %v2036 = vld [vmem:[#allocation2 + $0x128] sm:$0xff]
      %v2037 = vld [vmem:[#allocation2 + $0x130] sm:$0xff]
      %v2038 = vld [vmem:[#allocation2 + $0x138] sm:$0xff]
      %v2039 = vld [vmem:[#allocation2 + $0x140] sm:$0xff]
      %v2040 = vld [vmem:[#allocation2 + $0x148] sm:$0xff]
      %v2041 = vld [vmem:[#allocation2 + $0x150] sm:$0xff]
      %v2042 = vld [vmem:[#allocation2 + $0x158] sm:$0xff]
      %v2043 = vld [vmem:[#allocation2 + $0x160] sm:$0xff]
      %v2044 = vld [vmem:[#allocation2 + $0x168] sm:$0xff]
      %v2045 = vld [vmem:[#allocation2 + $0x170] sm:$0xff]
      %v2046 = vld [vmem:[#allocation2 + $0x178] sm:$0xff]
      %v2047 = vld [vmem:[#allocation2 + $0x180] sm:$0xff]
      %v2048 = vld [vmem:[#allocation2 + $0x188] sm:$0xff]
      %v2049 = vld [vmem:[#allocation2 + $0x190] sm:$0xff]
      %v2050 = vld [vmem:[#allocation2 + $0x198] sm:$0xff]
      %v2051 = vld [vmem:[#allocation2 + $0x1a0] sm:$0xff]
      %v2052 = vld [vmem:[#allocation2 + $0x1a8] sm:$0xff]
      %v2053 = vld [vmem:[#allocation2 + $0x1b0] sm:$0xff]
      %v2054 = vld [vmem:[#allocation2 + $0x1b8] sm:$0xff]
      %v2055 = vld [vmem:[#allocation2 + $0x1c0] sm:$0xff]
      %v2056 = vld [vmem:[#allocation2 + $0x1c8] sm:$0xff]
      %v2057 = vld [vmem:[#allocation2 + $0x1d0] sm:$0xff]
      %v2058 = vld [vmem:[#allocation2 + $0x1d8] sm:$0xff]
      %v2059 = vld [vmem:[#allocation2 + $0x1e0] sm:$0xff]
      %v2060 = vld [vmem:[#allocation2 + $0x1e8] sm:$0xff]
      %v2061 = vld [vmem:[#allocation2 + $0x1f0] sm:$0xff]
      %v2062 = vld [vmem:[#allocation2 + $0x1f8] sm:$0xff]
      %v2063 = vld [vmem:[#allocation2 + $0x200] sm:$0xff]
      %v2064 = vld [vmem:[#allocation2 + $0x208] sm:$0xff]
      %v2065 = vld [vmem:[#allocation2 + $0x210] sm:$0xff]
      %v2066 = vld [vmem:[#allocation2 + $0x218] sm:$0xff]
      %v2067 = vld [vmem:[#allocation2 + $0x220] sm:$0xff]
      %v2068 = vld [vmem:[#allocation2 + $0x228] sm:$0xff]
      %v2069 = vld [vmem:[#allocation2 + $0x230] sm:$0xff]
      %v2070 = vld [vmem:[#allocation2 + $0x238] sm:$0xff]
      %v2071 = vld [vmem:[#allocation2 + $0x240] sm:$0xff]
      %v2072 = vld [vmem:[#allocation2 + $0x248] sm:$0xff]
      %v2073 = vld [vmem:[#allocation2 + $0x250] sm:$0xff]
      %v2074 = vld [vmem:[#allocation2 + $0x258] sm:$0xff]
      %v2075 = vld [vmem:[#allocation2 + $0x260] sm:$0xff]
      %v2076 = vld [vmem:[#allocation2 + $0x268] sm:$0xff]
      %v2077 = vld [vmem:[#allocation2 + $0x270] sm:$0xff]
      %v2078 = vld [vmem:[#allocation2 + $0x278] sm:$0xff]
      %v2079 = vld [vmem:[#allocation2 + $0x280] sm:$0xff]
      %v2080 = vld [vmem:[#allocation2 + $0x288] sm:$0xff]
      %v2081 = vld [vmem:[#allocation2 + $0x290] sm:$0xff]
      %v2082 = vld [vmem:[#allocation2 + $0x298] sm:$0xff]
      %v2083 = vld [vmem:[#allocation2 + $0x2a0] sm:$0xff]
      %v2084 = vld [vmem:[#allocation2 + $0x2a8] sm:$0xff]
      %v2085 = vld [vmem:[#allocation2 + $0x2b0] sm:$0xff]
      %v2086 = vld [vmem:[#allocation2 + $0x2b8] sm:$0xff]
      %v2087 = vld [vmem:[#allocation2 + $0x2c0] sm:$0xff]
      %v2088 = vld [vmem:[#allocation2 + $0x2c8] sm:$0xff]
      %v2089 = vld [vmem:[#allocation2 + $0x2d0] sm:$0xff]
      %v2090 = vld [vmem:[#allocation2 + $0x2d8] sm:$0xff]
      %v2091 = vld [vmem:[#allocation2 + $0x2e0] sm:$0xff]
      %v2092 = vld [vmem:[#allocation2 + $0x2e8] sm:$0xff]
      %v2093 = vld [vmem:[#allocation2 + $0x2f0] sm:$0xff]
      %v2094 = vld [vmem:[#allocation2 + $0x2f8] sm:$0xff]
      %v2095 = vld [vmem:[#allocation2 + $0x300] sm:$0xff]
      %v2096 = vld [vmem:[#allocation2 + $0x308] sm:$0xff]
      %v2097 = vld [vmem:[#allocation2 + $0x310] sm:$0xff]
      %v2098 = vld [vmem:[#allocation2 + $0x318] sm:$0xff]
      %v2099 = vld [vmem:[#allocation2 + $0x320] sm:$0xff]
      %v2100 = vld [vmem:[#allocation2 + $0x328] sm:$0xff]
      %v2101 = vld [vmem:[#allocation2 + $0x330] sm:$0xff]
      %v2102 = vld [vmem:[#allocation2 + $0x338] sm:$0xff]
      %v2103 = vld [vmem:[#allocation2 + $0x340] sm:$0xff]
      %v2104 = vld [vmem:[#allocation2 + $0x348] sm:$0xff]
      %v2105 = vld [vmem:[#allocation2 + $0x350] sm:$0xff]
      %v2106 = vld [vmem:[#allocation2 + $0x358] sm:$0xff]
      %v2107 = vld [vmem:[#allocation2 + $0x360] sm:$0xff]
      %v2108 = vld [vmem:[#allocation2 + $0x368] sm:$0xff]
      %v2109 = vld [vmem:[#allocation2 + $0x370] sm:$0xff]
      %v2110 = vld [vmem:[#allocation2 + $0x378] sm:$0xff]
      %v2111 = vld [vmem:[#allocation2 + $0x380] sm:$0xff]
      %v2112 = vld [vmem:[#allocation2 + $0x388] sm:$0xff]
      %v2113 = vld [vmem:[#allocation2 + $0x390] sm:$0xff]
      %v2114 = vld [vmem:[#allocation2 + $0x398] sm:$0xff]
      %v2115 = vld [vmem:[#allocation2 + $0x3a0] sm:$0xff]
      %v2116 = vld [vmem:[#allocation2 + $0x3a8] sm:$0xff]
      %v2117 = vld [vmem:[#allocation2 + $0x3b0] sm:$0xff]
      %v2118 = vld [vmem:[#allocation2 + $0x3b8] sm:$0xff]
      %v2119 = vld [vmem:[#allocation2 + $0x3c0] sm:$0xff]
      %v2120 = vld [vmem:[#allocation2 + $0x3c8] sm:$0xff]
      %v2121 = vld [vmem:[#allocation2 + $0x3d0] sm:$0xff]
      %v2122 = vld [vmem:[#allocation2 + $0x3d8] sm:$0xff]
      %v2123 = vld [vmem:[#allocation2 + $0x3e0] sm:$0xff]
      %v2124 = vld [vmem:[#allocation2 + $0x3e8] sm:$0xff]
      %v2125 = vld [vmem:[#allocation2 + $0x3f0] sm:$0xff]
      %v2126 = vld [vmem:[#allocation2 + $0x3f8] sm:$0xff]
      %v2127 = vld [vmem:[#allocation2 + $0x400] sm:$0xff]
      %v2128 = vld [vmem:[#allocation2 + $0x408] sm:$0xff]
      %v2129 = vld [vmem:[#allocation2 + $0x410] sm:$0xff]
      %v2130 = vld [vmem:[#allocation2 + $0x418] sm:$0xff]
      %v2131 = vld [vmem:[#allocation2 + $0x420] sm:$0xff]
      %v2132 = vld [vmem:[#allocation2 + $0x428] sm:$0xff]
      %v2133 = vld [vmem:[#allocation2 + $0x430] sm:$0xff]
      %v2134 = vld [vmem:[#allocation2 + $0x438] sm:$0xff]
      %v2135 = vld [vmem:[#allocation2 + $0x440] sm:$0xff]
      %v2136 = vld [vmem:[#allocation2 + $0x448] sm:$0xff]
      %v2137 = vld [vmem:[#allocation2 + $0x450] sm:$0xff]
      %v2138 = vld [vmem:[#allocation2 + $0x458] sm:$0xff]
      %v2139 = vld [vmem:[#allocation2 + $0x460] sm:$0xff]
      %v2140 = vld [vmem:[#allocation2 + $0x468] sm:$0xff]
      %v2141 = vld [vmem:[#allocation2 + $0x470] sm:$0xff]
      %v2142 = vld [vmem:[#allocation2 + $0x478] sm:$0xff]
      %v2143 = vmin.f32 %v1999, %v1855
      %v2144 = vmin.f32 %v2000, %v1856
      %v2145 = vmin.f32 %v2001, %v1857
      %v2146 = vmin.f32 %v2002, %v1858
      %v2147 = vmin.f32 %v2003, %v1859
      %v2148 = vmin.f32 %v2004, %v1860
      %v2149 = vmin.f32 %v2005, %v1861
      %v2150 = vmin.f32 %v2006, %v1862
      %v2151 = vmin.f32 %v2007, %v1863
      %v2152 = vmin.f32 %v2008, %v1864
      %v2153 = vmin.f32 %v2009, %v1865
      %v2154 = vmin.f32 %v2010, %v1866
      %v2155 = vmin.f32 %v2011, %v1867
      %v2156 = vmin.f32 %v2012, %v1868
      %v2157 = vmin.f32 %v2013, %v1869
      %v2158 = vmin.f32 %v2014, %v1870
      %v2159 = vmin.f32 %v2015, %v1871
      %v2160 = vmin.f32 %v2016, %v1872
      %v2161 = vmin.f32 %v2017, %v1873
      %v2162 = vmin.f32 %v2018, %v1874
      %v2163 = vmin.f32 %v2019, %v1875
      %v2164 = vmin.f32 %v2020, %v1876
      %v2165 = vmin.f32 %v2021, %v1877
      %v2166 = vmin.f32 %v2022, %v1878
      %v2167 = vmin.f32 %v2023, %v1879
      %v2168 = vmin.f32 %v2024, %v1880
      %v2169 = vmin.f32 %v2025, %v1881
      %v2170 = vmin.f32 %v2026, %v1882
      %v2171 = vmin.f32 %v2027, %v1883
      %v2172 = vmin.f32 %v2028, %v1884
      %v2173 = vmin.f32 %v2029, %v1885
      %v2174 = vmin.f32 %v2030, %v1886
      %v2175 = vmin.f32 %v2031, %v1887
      %v2176 = vmin.f32 %v2032, %v1888
      %v2177 = vmin.f32 %v2033, %v1889
      %v2178 = vmin.f32 %v2034, %v1890
      %v2179 = vmin.f32 %v2035, %v1891
      %v2180 = vmin.f32 %v2036, %v1892
      %v2181 = vmin.f32 %v2037, %v1893
      %v2182 = vmin.f32 %v2038, %v1894
      %v2183 = vmin.f32 %v2039, %v1895
      %v2184 = vmin.f32 %v2040, %v1896
      %v2185 = vmin.f32 %v2041, %v1897
      %v2186 = vmin.f32 %v2042, %v1898
      %v2187 = vmin.f32 %v2043, %v1899
      %v2188 = vmin.f32 %v2044, %v1900
      %v2189 = vmin.f32 %v2045, %v1901
      %v2190 = vmin.f32 %v2046, %v1902
      %v2191 = vmin.f32 %v2047, %v1903
      %v2192 = vmin.f32 %v2048, %v1904
      %v2193 = vmin.f32 %v2049, %v1905
      %v2194 = vmin.f32 %v2050, %v1906
      %v2195 = vmin.f32 %v2051, %v1907
      %v2196 = vmin.f32 %v2052, %v1908
      %v2197 = vmin.f32 %v2053, %v1909
      %v2198 = vmin.f32 %v2054, %v1910
      %v2199 = vmin.f32 %v2055, %v1911
      %v2200 = vmin.f32 %v2056, %v1912
      %v2201 = vmin.f32 %v2057, %v1913
      %v2202 = vmin.f32 %v2058, %v1914
      %v2203 = vmin.f32 %v2059, %v1915
      %v2204 = vmin.f32 %v2060, %v1916
      %v2205 = vmin.f32 %v2061, %v1917
      %v2206 = vmin.f32 %v2062, %v1918
      %v2207 = vmin.f32 %v2063, %v1919
      %v2208 = vmin.f32 %v2064, %v1920
      %v2209 = vmin.f32 %v2065, %v1921
      %v2210 = vmin.f32 %v2066, %v1922
      %v2211 = vmin.f32 %v2067, %v1923
      %v2212 = vmin.f32 %v2068, %v1924
      %v2213 = vmin.f32 %v2069, %v1925
      %v2214 = vmin.f32 %v2070, %v1926
      %v2215 = vmin.f32 %v2071, %v1927
      %v2216 = vmin.f32 %v2072, %v1928
      %v2217 = vmin.f32 %v2073, %v1929
      %v2218 = vmin.f32 %v2074, %v1930
      %v2219 = vmin.f32 %v2075, %v1931
      %v2220 = vmin.f32 %v2076, %v1932
      %v2221 = vmin.f32 %v2077, %v1933
      %v2222 = vmin.f32 %v2078, %v1934
      %v2223 = vmin.f32 %v2079, %v1935
      %v2224 = vmin.f32 %v2080, %v1936
      %v2225 = vmin.f32 %v2081, %v1937
      %v2226 = vmin.f32 %v2082, %v1938
      %v2227 = vmin.f32 %v2083, %v1939
      %v2228 = vmin.f32 %v2084, %v1940
      %v2229 = vmin.f32 %v2085, %v1941
      %v2230 = vmin.f32 %v2086, %v1942
      %v2231 = vmin.f32 %v2087, %v1943
      %v2232 = vmin.f32 %v2088, %v1944
      %v2233 = vmin.f32 %v2089, %v1945
      %v2234 = vmin.f32 %v2090, %v1946
      %v2235 = vmin.f32 %v2091, %v1947
      %v2236 = vmin.f32 %v2092, %v1948
      %v2237 = vmin.f32 %v2093, %v1949
      %v2238 = vmin.f32 %v2094, %v1950
      %v2239 = vmin.f32 %v2095, %v1951
      %v2240 = vmin.f32 %v2096, %v1952
      %v2241 = vmin.f32 %v2097, %v1953
      %v2242 = vmin.f32 %v2098, %v1954
      %v2243 = vmin.f32 %v2099, %v1955
      %v2244 = vmin.f32 %v2100, %v1956
      %v2245 = vmin.f32 %v2101, %v1957
      %v2246 = vmin.f32 %v2102, %v1958
      %v2247 = vmin.f32 %v2103, %v1959
      %v2248 = vmin.f32 %v2104, %v1960
      %v2249 = vmin.f32 %v2105, %v1961
      %v2250 = vmin.f32 %v2106, %v1962
      %v2251 = vmin.f32 %v2107, %v1963
      %v2252 = vmin.f32 %v2108, %v1964
      %v2253 = vmin.f32 %v2109, %v1965
      %v2254 = vmin.f32 %v2110, %v1966
      %v2255 = vmin.f32 %v2111, %v1967
      %v2256 = vmin.f32 %v2112, %v1968
      %v2257 = vmin.f32 %v2113, %v1969
      %v2258 = vmin.f32 %v2114, %v1970
      %v2259 = vmin.f32 %v2115, %v1971
      %v2260 = vmin.f32 %v2116, %v1972
      %v2261 = vmin.f32 %v2117, %v1973
      %v2262 = vmin.f32 %v2118, %v1974
      %v2263 = vmin.f32 %v2119, %v1975
      %v2264 = vmin.f32 %v2120, %v1976
      %v2265 = vmin.f32 %v2121, %v1977
      %v2266 = vmin.f32 %v2122, %v1978
      %v2267 = vmin.f32 %v2123, %v1979
      %v2268 = vmin.f32 %v2124, %v1980
      %v2269 = vmin.f32 %v2125, %v1981
      %v2270 = vmin.f32 %v2126, %v1982
      %v2271 = vmin.f32 %v2127, %v1983
      %v2272 = vmin.f32 %v2128, %v1984
      %v2273 = vmin.f32 %v2129, %v1985
      %v2274 = vmin.f32 %v2130, %v1986
      %v2275 = vmin.f32 %v2131, %v1987
      %v2276 = vmin.f32 %v2132, %v1988
      %v2277 = vmin.f32 %v2133, %v1989
      %v2278 = vmin.f32 %v2134, %v1990
      %v2279 = vmin.f32 %v2135, %v1991
      %v2280 = vmin.f32 %v2136, %v1992
      %v2281 = vmin.f32 %v2137, %v1993
      %v2282 = vmin.f32 %v2138, %v1994
      %v2283 = vmin.f32 %v2139, %v1995
      %v2284 = vmin.f32 %v2140, %v1996
      %v2285 = vmin.f32 %v2141, %v1997
      %v2286 = vmin.f32 %v2142, %v1998
      %2287 = vst [vmem:[#allocation2] sm:$0xff] %v2143
      %2288 = vst [vmem:[#allocation2 + $0x8] sm:$0xff] %v2144
      %2289 = vst [vmem:[#allocation2 + $0x10] sm:$0xff] %v2145
      %2290 = vst [vmem:[#allocation2 + $0x18] sm:$0xff] %v2146
      %2291 = vst [vmem:[#allocation2 + $0x20] sm:$0xff] %v2147
      %2292 = vst [vmem:[#allocation2 + $0x28] sm:$0xff] %v2148
      %2293 = vst [vmem:[#allocation2 + $0x30] sm:$0xff] %v2149
      %2294 = vst [vmem:[#allocation2 + $0x38] sm:$0xff] %v2150
      %2295 = vst [vmem:[#allocation2 + $0x40] sm:$0xff] %v2151
      %2296 = vst [vmem:[#allocation2 + $0x48] sm:$0xff] %v2152
      %2297 = vst [vmem:[#allocation2 + $0x50] sm:$0xff] %v2153
      %2298 = vst [vmem:[#allocation2 + $0x58] sm:$0xff] %v2154
      %2299 = vst [vmem:[#allocation2 + $0x60] sm:$0xff] %v2155
      %2300 = vst [vmem:[#allocation2 + $0x68] sm:$0xff] %v2156
      %2301 = vst [vmem:[#allocation2 + $0x70] sm:$0xff] %v2157
      %2302 = vst [vmem:[#allocation2 + $0x78] sm:$0xff] %v2158
      %2303 = vst [vmem:[#allocation2 + $0x80] sm:$0xff] %v2159
      %2304 = vst [vmem:[#allocation2 + $0x88] sm:$0xff] %v2160
      %2305 = vst [vmem:[#allocation2 + $0x90] sm:$0xff] %v2161
      %2306 = vst [vmem:[#allocation2 + $0x98] sm:$0xff] %v2162
      %2307 = vst [vmem:[#allocation2 + $0xa0] sm:$0xff] %v2163
      %2308 = vst [vmem:[#allocation2 + $0xa8] sm:$0xff] %v2164
      %2309 = vst [vmem:[#allocation2 + $0xb0] sm:$0xff] %v2165
      %2310 = vst [vmem:[#allocation2 + $0xb8] sm:$0xff] %v2166
      %2311 = vst [vmem:[#allocation2 + $0xc0] sm:$0xff] %v2167
      %2312 = vst [vmem:[#allocation2 + $0xc8] sm:$0xff] %v2168
      %2313 = vst [vmem:[#allocation2 + $0xd0] sm:$0xff] %v2169
      %2314 = vst [vmem:[#allocation2 + $0xd8] sm:$0xff] %v2170
      %2315 = vst [vmem:[#allocation2 + $0xe0] sm:$0xff] %v2171
      %2316 = vst [vmem:[#allocation2 + $0xe8] sm:$0xff] %v2172
      %2317 = vst [vmem:[#allocation2 + $0xf0] sm:$0xff] %v2173
      %2318 = vst [vmem:[#allocation2 + $0xf8] sm:$0xff] %v2174
      %2319 = vst [vmem:[#allocation2 + $0x100] sm:$0xff] %v2175
      %2320 = vst [vmem:[#allocation2 + $0x108] sm:$0xff] %v2176
      %2321 = vst [vmem:[#allocation2 + $0x110] sm:$0xff] %v2177
      %2322 = vst [vmem:[#allocation2 + $0x118] sm:$0xff] %v2178
      %2323 = vst [vmem:[#allocation2 + $0x120] sm:$0xff] %v2179
      %2324 = vst [vmem:[#allocation2 + $0x128] sm:$0xff] %v2180
      %2325 = vst [vmem:[#allocation2 + $0x130] sm:$0xff] %v2181
      %2326 = vst [vmem:[#allocation2 + $0x138] sm:$0xff] %v2182
      %2327 = vst [vmem:[#allocation2 + $0x140] sm:$0xff] %v2183
      %2328 = vst [vmem:[#allocation2 + $0x148] sm:$0xff] %v2184
      %2329 = vst [vmem:[#allocation2 + $0x150] sm:$0xff] %v2185
      %2330 = vst [vmem:[#allocation2 + $0x158] sm:$0xff] %v2186
      %2331 = vst [vmem:[#allocation2 + $0x160] sm:$0xff] %v2187
      %2332 = vst [vmem:[#allocation2 + $0x168] sm:$0xff] %v2188
      %2333 = vst [vmem:[#allocation2 + $0x170] sm:$0xff] %v2189
      %2334 = vst [vmem:[#allocation2 + $0x178] sm:$0xff] %v2190
      %2335 = vst [vmem:[#allocation2 + $0x180] sm:$0xff] %v2191
      %2336 = vst [vmem:[#allocation2 + $0x188] sm:$0xff] %v2192
      %2337 = vst [vmem:[#allocation2 + $0x190] sm:$0xff] %v2193
      %2338 = vst [vmem:[#allocation2 + $0x198] sm:$0xff] %v2194
      %2339 = vst [vmem:[#allocation2 + $0x1a0] sm:$0xff] %v2195
      %2340 = vst [vmem:[#allocation2 + $0x1a8] sm:$0xff] %v2196
      %2341 = vst [vmem:[#allocation2 + $0x1b0] sm:$0xff] %v2197
      %2342 = vst [vmem:[#allocation2 + $0x1b8] sm:$0xff] %v2198
      %2343 = vst [vmem:[#allocation2 + $0x1c0] sm:$0xff] %v2199
      %2344 = vst [vmem:[#allocation2 + $0x1c8] sm:$0xff] %v2200
      %2345 = vst [vmem:[#allocation2 + $0x1d0] sm:$0xff] %v2201
      %2346 = vst [vmem:[#allocation2 + $0x1d8] sm:$0xff] %v2202
      %2347 = vst [vmem:[#allocation2 + $0x1e0] sm:$0xff] %v2203
      %2348 = vst [vmem:[#allocation2 + $0x1e8] sm:$0xff] %v2204
      %2349 = vst [vmem:[#allocation2 + $0x1f0] sm:$0xff] %v2205
      %2350 = vst [vmem:[#allocation2 + $0x1f8] sm:$0xff] %v2206
      %2351 = vst [vmem:[#allocation2 + $0x200] sm:$0xff] %v2207
      %2352 = vst [vmem:[#allocation2 + $0x208] sm:$0xff] %v2208
      %2353 = vst [vmem:[#allocation2 + $0x210] sm:$0xff] %v2209
      %2354 = vst [vmem:[#allocation2 + $0x218] sm:$0xff] %v2210
      %2355 = vst [vmem:[#allocation2 + $0x220] sm:$0xff] %v2211
      %2356 = vst [vmem:[#allocation2 + $0x228] sm:$0xff] %v2212
      %2357 = vst [vmem:[#allocation2 + $0x230] sm:$0xff] %v2213
      %2358 = vst [vmem:[#allocation2 + $0x238] sm:$0xff] %v2214
      %2359 = vst [vmem:[#allocation2 + $0x240] sm:$0xff] %v2215
      %2360 = vst [vmem:[#allocation2 + $0x248] sm:$0xff] %v2216
      %2361 = vst [vmem:[#allocation2 + $0x250] sm:$0xff] %v2217
      %2362 = vst [vmem:[#allocation2 + $0x258] sm:$0xff] %v2218
      %2363 = vst [vmem:[#allocation2 + $0x260] sm:$0xff] %v2219
      %2364 = vst [vmem:[#allocation2 + $0x268] sm:$0xff] %v2220
      %2365 = vst [vmem:[#allocation2 + $0x270] sm:$0xff] %v2221
      %2366 = vst [vmem:[#allocation2 + $0x278] sm:$0xff] %v2222
      %2367 = vst [vmem:[#allocation2 + $0x280] sm:$0xff] %v2223
      %2368 = vst [vmem:[#allocation2 + $0x288] sm:$0xff] %v2224
      %2369 = vst [vmem:[#allocation2 + $0x290] sm:$0xff] %v2225
      %2370 = vst [vmem:[#allocation2 + $0x298] sm:$0xff] %v2226
      %2371 = vst [vmem:[#allocation2 + $0x2a0] sm:$0xff] %v2227
      %2372 = vst [vmem:[#allocation2 + $0x2a8] sm:$0xff] %v2228
      %2373 = vst [vmem:[#allocation2 + $0x2b0] sm:$0xff] %v2229
      %2374 = vst [vmem:[#allocation2 + $0x2b8] sm:$0xff] %v2230
      %2375 = vst [vmem:[#allocation2 + $0x2c0] sm:$0xff] %v2231
      %2376 = vst [vmem:[#allocation2 + $0x2c8] sm:$0xff] %v2232
      %2377 = vst [vmem:[#allocation2 + $0x2d0] sm:$0xff] %v2233
      %2378 = vst [vmem:[#allocation2 + $0x2d8] sm:$0xff] %v2234
      %2379 = vst [vmem:[#allocation2 + $0x2e0] sm:$0xff] %v2235
      %2380 = vst [vmem:[#allocation2 + $0x2e8] sm:$0xff] %v2236
      %2381 = vst [vmem:[#allocation2 + $0x2f0] sm:$0xff] %v2237
      %2382 = vst [vmem:[#allocation2 + $0x2f8] sm:$0xff] %v2238
      %2383 = vst [vmem:[#allocation2 + $0x300] sm:$0xff] %v2239
      %2384 = vst [vmem:[#allocation2 + $0x308] sm:$0xff] %v2240
      %2385 = vst [vmem:[#allocation2 + $0x310] sm:$0xff] %v2241
      %2386 = vst [vmem:[#allocation2 + $0x318] sm:$0xff] %v2242
      %2387 = vst [vmem:[#allocation2 + $0x320] sm:$0xff] %v2243
      %2388 = vst [vmem:[#allocation2 + $0x328] sm:$0xff] %v2244
      %2389 = vst [vmem:[#allocation2 + $0x330] sm:$0xff] %v2245
      %2390 = vst [vmem:[#allocation2 + $0x338] sm:$0xff] %v2246
      %2391 = vst [vmem:[#allocation2 + $0x340] sm:$0xff] %v2247
      %2392 = vst [vmem:[#allocation2 + $0x348] sm:$0xff] %v2248
      %2393 = vst [vmem:[#allocation2 + $0x350] sm:$0xff] %v2249
      %2394 = vst [vmem:[#allocation2 + $0x358] sm:$0xff] %v2250
      %2395 = vst [vmem:[#allocation2 + $0x360] sm:$0xff] %v2251
      %2396 = vst [vmem:[#allocation2 + $0x368] sm:$0xff] %v2252
      %2397 = vst [vmem:[#allocation2 + $0x370] sm:$0xff] %v2253
      %2398 = vst [vmem:[#allocation2 + $0x378] sm:$0xff] %v2254
      %2399 = vst [vmem:[#allocation2 + $0x380] sm:$0xff] %v2255
      %2400 = vst [vmem:[#allocation2 + $0x388] sm:$0xff] %v2256
      %2401 = vst [vmem:[#allocation2 + $0x390] sm:$0xff] %v2257
      %2402 = vst [vmem:[#allocation2 + $0x398] sm:$0xff] %v2258
      %2403 = vst [vmem:[#allocation2 + $0x3a0] sm:$0xff] %v2259
      %2404 = vst [vmem:[#allocation2 + $0x3a8] sm:$0xff] %v2260
      %2405 = vst [vmem:[#allocation2 + $0x3b0] sm:$0xff] %v2261
      %2406 = vst [vmem:[#allocation2 + $0x3b8] sm:$0xff] %v2262
      %2407 = vst [vmem:[#allocation2 + $0x3c0] sm:$0xff] %v2263
      %2408 = vst [vmem:[#allocation2 + $0x3c8] sm:$0xff] %v2264
      %2409 = vst [vmem:[#allocation2 + $0x3d0] sm:$0xff] %v2265
      %2410 = vst [vmem:[#allocation2 + $0x3d8] sm:$0xff] %v2266
      %2411 = vst [vmem:[#allocation2 + $0x3e0] sm:$0xff] %v2267
      %2412 = vst [vmem:[#allocation2 + $0x3e8] sm:$0xff] %v2268
      %2413 = vst [vmem:[#allocation2 + $0x3f0] sm:$0xff] %v2269
      %2414 = vst [vmem:[#allocation2 + $0x3f8] sm:$0xff] %v2270
      %2415 = vst [vmem:[#allocation2 + $0x400] sm:$0xff] %v2271
      %2416 = vst [vmem:[#allocation2 + $0x408] sm:$0xff] %v2272
      %2417 = vst [vmem:[#allocation2 + $0x410] sm:$0xff] %v2273
      %2418 = vst [vmem:[#allocation2 + $0x418] sm:$0xff] %v2274
      %2419 = vst [vmem:[#allocation2 + $0x420] sm:$0xff] %v2275
      %2420 = vst [vmem:[#allocation2 + $0x428] sm:$0xff] %v2276
      %2421 = vst [vmem:[#allocation2 + $0x430] sm:$0xff] %v2277
      %2422 = vst [vmem:[#allocation2 + $0x438] sm:$0xff] %v2278
      %2423 = vst [vmem:[#allocation2 + $0x440] sm:$0xff] %v2279
      %2424 = vst [vmem:[#allocation2 + $0x448] sm:$0xff] %v2280
      %2425 = vst [vmem:[#allocation2 + $0x450] sm:$0xff] %v2281
      %2426 = vst [vmem:[#allocation2 + $0x458] sm:$0xff] %v2282
      %2427 = vst [vmem:[#allocation2 + $0x460] sm:$0xff] %v2283
      %2428 = vst [vmem:[#allocation2 + $0x468] sm:$0xff] %v2284
      %2429 = vst [vmem:[#allocation2 + $0x470] sm:$0xff] %v2285
      %2430 = vst [vmem:[#allocation2 + $0x478] sm:$0xff] %v2286
      %p2431 = scmp.eq.s32.totalorder %s18, 1
      // Predicated region
      $region33: #{forward.1} parent=27 // pred_check
        %p2432 = pneg %p2431
      $region34: #{forward.1} parent=27 // pred_check_branch
        %2434 = sbr.rel (%p2432) target = $region36
      $region35: #{forward.1} parent=27 // pred_region
        %v2435 = vld [vmem:[#allocation2] sm:$0xff]
        %v2436 = vld [vmem:[#allocation2 + $0x8] sm:$0xff]
        %v2437 = vld [vmem:[#allocation2 + $0x10] sm:$0xff]
        %v2438 = vld [vmem:[#allocation2 + $0x18] sm:$0xff]
        %v2439 = vld [vmem:[#allocation2 + $0x20] sm:$0xff]
        %v2440 = vld [vmem:[#allocation2 + $0x28] sm:$0xff]
        %v2441 = vld [vmem:[#allocation2 + $0x30] sm:$0xff]
        %v2442 = vld [vmem:[#allocation2 + $0x38] sm:$0xff]
        %v2443 = vld [vmem:[#allocation2 + $0x40] sm:$0xff]
        %v2444 = vld [vmem:[#allocation2 + $0x48] sm:$0xff]
        %v2445 = vld [vmem:[#allocation2 + $0x50] sm:$0xff]
        %v2446 = vld [vmem:[#allocation2 + $0x58] sm:$0xff]
        %v2447 = vld [vmem:[#allocation2 + $0x60] sm:$0xff]
        %v2448 = vld [vmem:[#allocation2 + $0x68] sm:$0xff]
        %v2449 = vld [vmem:[#allocation2 + $0x70] sm:$0xff]
        %v2450 = vld [vmem:[#allocation2 + $0x78] sm:$0xff]
        %v2451 = vld [vmem:[#allocation2 + $0x80] sm:$0xff]
        %v2452 = vld [vmem:[#allocation2 + $0x88] sm:$0xff]
        %v2453 = vld [vmem:[#allocation2 + $0x90] sm:$0xff]
        %v2454 = vld [vmem:[#allocation2 + $0x98] sm:$0xff]
        %v2455 = vld [vmem:[#allocation2 + $0xa0] sm:$0xff]
        %v2456 = vld [vmem:[#allocation2 + $0xa8] sm:$0xff]
        %v2457 = vld [vmem:[#allocation2 + $0xb0] sm:$0xff]
        %v2458 = vld [vmem:[#allocation2 + $0xb8] sm:$0xff]
        %v2459 = vld [vmem:[#allocation2 + $0xc0] sm:$0xff]
        %v2460 = vld [vmem:[#allocation2 + $0xc8] sm:$0xff]
        %v2461 = vld [vmem:[#allocation2 + $0xd0] sm:$0xff]
        %v2462 = vld [vmem:[#allocation2 + $0xd8] sm:$0xff]
        %v2463 = vld [vmem:[#allocation2 + $0xe0] sm:$0xff]
        %v2464 = vld [vmem:[#allocation2 + $0xe8] sm:$0xff]
        %v2465 = vld [vmem:[#allocation2 + $0xf0] sm:$0xff]
        %v2466 = vld [vmem:[#allocation2 + $0xf8] sm:$0xff]
        %v2467 = vld [vmem:[#allocation2 + $0x100] sm:$0xff]
        %v2468 = vld [vmem:[#allocation2 + $0x108] sm:$0xff]
        %v2469 = vld [vmem:[#allocation2 + $0x110] sm:$0xff]
        %v2470 = vld [vmem:[#allocation2 + $0x118] sm:$0xff]
        %v2471 = vld [vmem:[#allocation2 + $0x120] sm:$0xff]
        %v2472 = vld [vmem:[#allocation2 + $0x128] sm:$0xff]
        %v2473 = vld [vmem:[#allocation2 + $0x130] sm:$0xff]
        %v2474 = vld [vmem:[#allocation2 + $0x138] sm:$0xff]
        %v2475 = vld [vmem:[#allocation2 + $0x140] sm:$0xff]
        %v2476 = vld [vmem:[#allocation2 + $0x148] sm:$0xff]
        %v2477 = vld [vmem:[#allocation2 + $0x150] sm:$0xff]
        %v2478 = vld [vmem:[#allocation2 + $0x158] sm:$0xff]
        %v2479 = vld [vmem:[#allocation2 + $0x160] sm:$0xff]
        %v2480 = vld [vmem:[#allocation2 + $0x168] sm:$0xff]
        %v2481 = vld [vmem:[#allocation2 + $0x170] sm:$0xff]
        %v2482 = vld [vmem:[#allocation2 + $0x178] sm:$0xff]
        %v2483 = vld [vmem:[#allocation2 + $0x180] sm:$0xff]
        %v2484 = vld [vmem:[#allocation2 + $0x188] sm:$0xff]
        %v2485 = vld [vmem:[#allocation2 + $0x190] sm:$0xff]
        %v2486 = vld [vmem:[#allocation2 + $0x198] sm:$0xff]
        %v2487 = vld [vmem:[#allocation2 + $0x1a0] sm:$0xff]
        %v2488 = vld [vmem:[#allocation2 + $0x1a8] sm:$0xff]
        %v2489 = vld [vmem:[#allocation2 + $0x1b0] sm:$0xff]
        %v2490 = vld [vmem:[#allocation2 + $0x1b8] sm:$0xff]
        %v2491 = vld [vmem:[#allocation2 + $0x1c0] sm:$0xff]
        %v2492 = vld [vmem:[#allocation2 + $0x1c8] sm:$0xff]
        %v2493 = vld [vmem:[#allocation2 + $0x1d0] sm:$0xff]
        %v2494 = vld [vmem:[#allocation2 + $0x1d8] sm:$0xff]
        %v2495 = vld [vmem:[#allocation2 + $0x1e0] sm:$0xff]
        %v2496 = vld [vmem:[#allocation2 + $0x1e8] sm:$0xff]
        %v2497 = vld [vmem:[#allocation2 + $0x1f0] sm:$0xff]
        %v2498 = vld [vmem:[#allocation2 + $0x1f8] sm:$0xff]
        %v2499 = vld [vmem:[#allocation2 + $0x200] sm:$0xff]
        %v2500 = vld [vmem:[#allocation2 + $0x208] sm:$0xff]
        %v2501 = vld [vmem:[#allocation2 + $0x210] sm:$0xff]
        %v2502 = vld [vmem:[#allocation2 + $0x218] sm:$0xff]
        %v2503 = vld [vmem:[#allocation2 + $0x220] sm:$0xff]
        %v2504 = vld [vmem:[#allocation2 + $0x228] sm:$0xff]
        %v2505 = vld [vmem:[#allocation2 + $0x230] sm:$0xff]
        %v2506 = vld [vmem:[#allocation2 + $0x238] sm:$0xff]
        %v2507 = vld [vmem:[#allocation2 + $0x240] sm:$0xff]
        %v2508 = vld [vmem:[#allocation2 + $0x248] sm:$0xff]
        %v2509 = vld [vmem:[#allocation2 + $0x250] sm:$0xff]
        %v2510 = vld [vmem:[#allocation2 + $0x258] sm:$0xff]
        %v2511 = vld [vmem:[#allocation2 + $0x260] sm:$0xff]
        %v2512 = vld [vmem:[#allocation2 + $0x268] sm:$0xff]
        %v2513 = vld [vmem:[#allocation2 + $0x270] sm:$0xff]
        %v2514 = vld [vmem:[#allocation2 + $0x278] sm:$0xff]
        %v2515 = vld [vmem:[#allocation2 + $0x280] sm:$0xff]
        %v2516 = vld [vmem:[#allocation2 + $0x288] sm:$0xff]
        %v2517 = vld [vmem:[#allocation2 + $0x290] sm:$0xff]
        %v2518 = vld [vmem:[#allocation2 + $0x298] sm:$0xff]
        %v2519 = vld [vmem:[#allocation2 + $0x2a0] sm:$0xff]
        %v2520 = vld [vmem:[#allocation2 + $0x2a8] sm:$0xff]
        %v2521 = vld [vmem:[#allocation2 + $0x2b0] sm:$0xff]
        %v2522 = vld [vmem:[#allocation2 + $0x2b8] sm:$0xff]
        %v2523 = vld [vmem:[#allocation2 + $0x2c0] sm:$0xff]
        %v2524 = vld [vmem:[#allocation2 + $0x2c8] sm:$0xff]
        %v2525 = vld [vmem:[#allocation2 + $0x2d0] sm:$0xff]
        %v2526 = vld [vmem:[#allocation2 + $0x2d8] sm:$0xff]
        %v2527 = vld [vmem:[#allocation2 + $0x2e0] sm:$0xff]
        %v2528 = vld [vmem:[#allocation2 + $0x2e8] sm:$0xff]
        %v2529 = vld [vmem:[#allocation2 + $0x2f0] sm:$0xff]
        %v2530 = vld [vmem:[#allocation2 + $0x2f8] sm:$0xff]
        %v2531 = vld [vmem:[#allocation2 + $0x300] sm:$0xff]
        %v2532 = vld [vmem:[#allocation2 + $0x308] sm:$0xff]
        %v2533 = vld [vmem:[#allocation2 + $0x310] sm:$0xff]
        %v2534 = vld [vmem:[#allocation2 + $0x318] sm:$0xff]
        %v2535 = vld [vmem:[#allocation2 + $0x320] sm:$0xff]
        %v2536 = vld [vmem:[#allocation2 + $0x328] sm:$0xff]
        %v2537 = vld [vmem:[#allocation2 + $0x330] sm:$0xff]
        %v2538 = vld [vmem:[#allocation2 + $0x338] sm:$0xff]
        %v2539 = vld [vmem:[#allocation2 + $0x340] sm:$0xff]
        %v2540 = vld [vmem:[#allocation2 + $0x348] sm:$0xff]
        %v2541 = vld [vmem:[#allocation2 + $0x350] sm:$0xff]
        %v2542 = vld [vmem:[#allocation2 + $0x358] sm:$0xff]
        %v2543 = vld [vmem:[#allocation2 + $0x360] sm:$0xff]
        %v2544 = vld [vmem:[#allocation2 + $0x368] sm:$0xff]
        %v2545 = vld [vmem:[#allocation2 + $0x370] sm:$0xff]
        %v2546 = vld [vmem:[#allocation2 + $0x378] sm:$0xff]
        %v2547 = vld [vmem:[#allocation2 + $0x380] sm:$0xff]
        %v2548 = vld [vmem:[#allocation2 + $0x388] sm:$0xff]
        %v2549 = vld [vmem:[#allocation2 + $0x390] sm:$0xff]
        %v2550 = vld [vmem:[#allocation2 + $0x398] sm:$0xff]
        %v2551 = vld [vmem:[#allocation2 + $0x3a0] sm:$0xff]
        %v2552 = vld [vmem:[#allocation2 + $0x3a8] sm:$0xff]
        %v2553 = vld [vmem:[#allocation2 + $0x3b0] sm:$0xff]
        %v2554 = vld [vmem:[#allocation2 + $0x3b8] sm:$0xff]
        %v2555 = vld [vmem:[#allocation2 + $0x3c0] sm:$0xff]
        %v2556 = vld [vmem:[#allocation2 + $0x3c8] sm:$0xff]
        %v2557 = vld [vmem:[#allocation2 + $0x3d0] sm:$0xff]
        %v2558 = vld [vmem:[#allocation2 + $0x3d8] sm:$0xff]
        %v2559 = vld [vmem:[#allocation2 + $0x3e0] sm:$0xff]
        %v2560 = vld [vmem:[#allocation2 + $0x3e8] sm:$0xff]
        %v2561 = vld [vmem:[#allocation2 + $0x3f0] sm:$0xff]
        %v2562 = vld [vmem:[#allocation2 + $0x3f8] sm:$0xff]
        %v2563 = vld [vmem:[#allocation2 + $0x400] sm:$0xff]
        %v2564 = vld [vmem:[#allocation2 + $0x408] sm:$0xff]
        %v2565 = vld [vmem:[#allocation2 + $0x410] sm:$0xff]
        %v2566 = vld [vmem:[#allocation2 + $0x418] sm:$0xff]
        %v2567 = vld [vmem:[#allocation2 + $0x420] sm:$0xff]
        %v2568 = vld [vmem:[#allocation2 + $0x428] sm:$0xff]
        %v2569 = vld [vmem:[#allocation2 + $0x430] sm:$0xff]
        %v2570 = vld [vmem:[#allocation2 + $0x438] sm:$0xff]
        %v2571 = vld [vmem:[#allocation2 + $0x440] sm:$0xff]
        %v2572 = vld [vmem:[#allocation2 + $0x448] sm:$0xff]
        %v2573 = vld [vmem:[#allocation2 + $0x450] sm:$0xff]
        %v2574 = vld [vmem:[#allocation2 + $0x458] sm:$0xff]
        %v2575 = vld [vmem:[#allocation2 + $0x460] sm:$0xff]
        %v2576 = vld [vmem:[#allocation2 + $0x468] sm:$0xff]
        %v2577 = vld [vmem:[#allocation2 + $0x470] sm:$0xff]
        %v2578 = vld [vmem:[#allocation2 + $0x478] sm:$0xff]
        %v2579 = vmin.f32 %v2435, %v2436
        %v2580 = vmin.f32 %v2579, %v2437
        %v2581 = vmin.f32 %v2580, %v2438
        %v2582 = vmin.f32 %v2581, %v2439
        %v2583 = vmin.f32 %v2582, %v2440
        %v2584 = vmin.f32 %v2583, %v2441
        %v2585 = vmin.f32 %v2584, %v2442
        %v2586 = vmin.f32 %v2585, %v2443
        %v2587 = vmin.f32 %v2586, %v2444
        %v2588 = vmin.f32 %v2587, %v2445
        %v2589 = vmin.f32 %v2588, %v2446
        %v2590 = vmin.f32 %v2589, %v2447
        %v2591 = vmin.f32 %v2590, %v2448
        %v2592 = vmin.f32 %v2591, %v2449
        %v2593 = vmin.f32 %v2592, %v2450
        %2594 = vmin.xlane.f32.xlu0 %v2593
        %v2595 = vpop.xlane.xlu0 %2594
        %v2596 = vmin.f32 %v2451, %v2452
        %v2597 = vmin.f32 %v2596, %v2453
        %v2598 = vmin.f32 %v2597, %v2454
        %v2599 = vmin.f32 %v2598, %v2455
        %v2600 = vmin.f32 %v2599, %v2456
        %v2601 = vmin.f32 %v2600, %v2457
        %v2602 = vmin.f32 %v2601, %v2458
        %v2603 = vmin.f32 %v2602, %v2459
        %v2604 = vmin.f32 %v2603, %v2460
        %v2605 = vmin.f32 %v2604, %v2461
        %v2606 = vmin.f32 %v2605, %v2462
        %v2607 = vmin.f32 %v2606, %v2463
        %v2608 = vmin.f32 %v2607, %v2464
        %v2609 = vmin.f32 %v2608, %v2465
        %v2610 = vmin.f32 %v2609, %v2466
        %2611 = vmin.xlane.f32.xlu0 %v2610
        %v2612 = vpop.xlane.xlu0 %2611
        %v2613 = vmin.f32 %v2467, %v2468
        %v2614 = vmin.f32 %v2613, %v2469
        %v2615 = vmin.f32 %v2614, %v2470
        %v2616 = vmin.f32 %v2615, %v2471
        %v2617 = vmin.f32 %v2616, %v2472
        %v2618 = vmin.f32 %v2617, %v2473
        %v2619 = vmin.f32 %v2618, %v2474
        %v2620 = vmin.f32 %v2619, %v2475
        %v2621 = vmin.f32 %v2620, %v2476
        %v2622 = vmin.f32 %v2621, %v2477
        %v2623 = vmin.f32 %v2622, %v2478
        %v2624 = vmin.f32 %v2623, %v2479
        %v2625 = vmin.f32 %v2624, %v2480
        %v2626 = vmin.f32 %v2625, %v2481
        %v2627 = vmin.f32 %v2626, %v2482
        %2628 = vmin.xlane.f32.xlu0 %v2627
        %v2629 = vpop.xlane.xlu0 %2628
        %v2630 = vmin.f32 %v2483, %v2484
        %v2631 = vmin.f32 %v2630, %v2485
        %v2632 = vmin.f32 %v2631, %v2486
        %v2633 = vmin.f32 %v2632, %v2487
        %v2634 = vmin.f32 %v2633, %v2488
        %v2635 = vmin.f32 %v2634, %v2489
        %v2636 = vmin.f32 %v2635, %v2490
        %v2637 = vmin.f32 %v2636, %v2491
        %v2638 = vmin.f32 %v2637, %v2492
        %v2639 = vmin.f32 %v2638, %v2493
        %v2640 = vmin.f32 %v2639, %v2494
        %v2641 = vmin.f32 %v2640, %v2495
        %v2642 = vmin.f32 %v2641, %v2496
        %v2643 = vmin.f32 %v2642, %v2497
        %v2644 = vmin.f32 %v2643, %v2498
        %2645 = vmin.xlane.f32.xlu0 %v2644
        %v2646 = vpop.xlane.xlu0 %2645
        %v2647 = vmin.f32 %v2499, %v2500
        %v2648 = vmin.f32 %v2647, %v2501
        %v2649 = vmin.f32 %v2648, %v2502
        %v2650 = vmin.f32 %v2649, %v2503
        %v2651 = vmin.f32 %v2650, %v2504
        %v2652 = vmin.f32 %v2651, %v2505
        %v2653 = vmin.f32 %v2652, %v2506
        %v2654 = vmin.f32 %v2653, %v2507
        %v2655 = vmin.f32 %v2654, %v2508
        %v2656 = vmin.f32 %v2655, %v2509
        %v2657 = vmin.f32 %v2656, %v2510
        %v2658 = vmin.f32 %v2657, %v2511
        %v2659 = vmin.f32 %v2658, %v2512
        %v2660 = vmin.f32 %v2659, %v2513
        %v2661 = vmin.f32 %v2660, %v2514
        %2662 = vmin.xlane.f32.xlu0 %v2661
        %v2663 = vpop.xlane.xlu0 %2662
        %v2664 = vmin.f32 %v2515, %v2516
        %v2665 = vmin.f32 %v2664, %v2517
        %v2666 = vmin.f32 %v2665, %v2518
        %v2667 = vmin.f32 %v2666, %v2519
        %v2668 = vmin.f32 %v2667, %v2520
        %v2669 = vmin.f32 %v2668, %v2521
        %v2670 = vmin.f32 %v2669, %v2522
        %v2671 = vmin.f32 %v2670, %v2523
        %v2672 = vmin.f32 %v2671, %v2524
        %v2673 = vmin.f32 %v2672, %v2525
        %v2674 = vmin.f32 %v2673, %v2526
        %v2675 = vmin.f32 %v2674, %v2527
        %v2676 = vmin.f32 %v2675, %v2528
        %v2677 = vmin.f32 %v2676, %v2529
        %v2678 = vmin.f32 %v2677, %v2530
        %2679 = vmin.xlane.f32.xlu0 %v2678
        %v2680 = vpop.xlane.xlu0 %2679
        %v2681 = vmin.f32 %v2531, %v2532
        %v2682 = vmin.f32 %v2681, %v2533
        %v2683 = vmin.f32 %v2682, %v2534
        %v2684 = vmin.f32 %v2683, %v2535
        %v2685 = vmin.f32 %v2684, %v2536
        %v2686 = vmin.f32 %v2685, %v2537
        %v2687 = vmin.f32 %v2686, %v2538
        %v2688 = vmin.f32 %v2687, %v2539
        %v2689 = vmin.f32 %v2688, %v2540
        %v2690 = vmin.f32 %v2689, %v2541
        %v2691 = vmin.f32 %v2690, %v2542
        %v2692 = vmin.f32 %v2691, %v2543
        %v2693 = vmin.f32 %v2692, %v2544
        %v2694 = vmin.f32 %v2693, %v2545
        %v2695 = vmin.f32 %v2694, %v2546
        %2696 = vmin.xlane.f32.xlu0 %v2695
        %v2697 = vpop.xlane.xlu0 %2696
        %v2698 = vmin.f32 %v2547, %v2548
        %v2699 = vmin.f32 %v2698, %v2549
        %v2700 = vmin.f32 %v2699, %v2550
        %v2701 = vmin.f32 %v2700, %v2551
        %v2702 = vmin.f32 %v2701, %v2552
        %v2703 = vmin.f32 %v2702, %v2553
        %v2704 = vmin.f32 %v2703, %v2554
        %v2705 = vmin.f32 %v2704, %v2555
        %v2706 = vmin.f32 %v2705, %v2556
        %v2707 = vmin.f32 %v2706, %v2557
        %v2708 = vmin.f32 %v2707, %v2558
        %v2709 = vmin.f32 %v2708, %v2559
        %v2710 = vmin.f32 %v2709, %v2560
        %v2711 = vmin.f32 %v2710, %v2561
        %v2712 = vmin.f32 %v2711, %v2562
        %2713 = vmin.xlane.f32.xlu0 %v2712
        %v2714 = vpop.xlane.xlu0 %2713
        %v2715 = vmin.f32 %v2563, %v2564
        %v2716 = vmin.f32 %v2715, %v2565
        %v2717 = vmin.f32 %v2716, %v2566
        %v2718 = vmin.f32 %v2717, %v2567
        %v2719 = vmin.f32 %v2718, %v2568
        %v2720 = vmin.f32 %v2719, %v2569
        %v2721 = vmin.f32 %v2720, %v2570
        %v2722 = vmin.f32 %v2721, %v2571
        %v2723 = vmin.f32 %v2722, %v2572
        %v2724 = vmin.f32 %v2723, %v2573
        %v2725 = vmin.f32 %v2724, %v2574
        %v2726 = vmin.f32 %v2725, %v2575
        %v2727 = vmin.f32 %v2726, %v2576
        %v2728 = vmin.f32 %v2727, %v2577
        %v2729 = vmin.f32 %v2728, %v2578
        %2730 = vmin.xlane.f32.xlu0 %v2729
        %v2731 = vpop.xlane.xlu0 %2730
        %vm2732 = vcmask 7168
        %2733 = vst.msk [vmem:[%s171] sm:$0xff] %vm2732, %v2595
        %2734 = vst.msk [vmem:[%s171 + $0x8] sm:$0xff] %vm2732, %v2612
        %2735 = vst.msk [vmem:[%s171 + $0x10] sm:$0xff] %vm2732, %v2629
        %2736 = vst.msk [vmem:[%s171 + $0x18] sm:$0xff] %vm2732, %v2646
        %2737 = vst.msk [vmem:[%s171 + $0x20] sm:$0xff] %vm2732, %v2663
        %2738 = vst.msk [vmem:[%s171 + $0x28] sm:$0xff] %vm2732, %v2680
        %2739 = vst.msk [vmem:[%s171 + $0x30] sm:$0xff] %vm2732, %v2697
        %2740 = vst.msk [vmem:[%s171 + $0x38] sm:$0xff] %vm2732, %v2714
        %2741 = vst.msk [vmem:[%s171 + $0x40] sm:$0xff] %vm2732, %v2731
      $region36: #{forward.1} parent=27 // pred_fallthru
        _
      %p2742 = scmp.lt.s32.totalorder %s17, 1
      %s2743 = scalar_select %p2742, %s17, 1
      %s2744 = smul.addr %s2743, 9
      %s2745 = smul.addr %s2744, 8
      %s2746 = scalar_lea.vmem %s2, %s2745
      // Predicated region
      $region37: #{forward.1} parent=27 // pred_check
        %p2747 = pneg %p94
      $region38: #{forward.1} parent=27 // pred_check_branch
        %2749 = sbr.rel (%p2747) target = $region40
      $region39: #{forward.1} parent=27 // pred_region
        _
      $region40: #{forward.1} parent=27 // pred_fallthru
        _
    $region28: #{forward.1} parent=5 // pred_fallthru
      _
    %p2750 = scmp.le.s32.totalorder 2, %s8
    // Predicated region
    $region41: #{forward.1} parent=5 // pred_check
      %p2751 = pneg %p2750
    $region42: #{forward.1} parent=5 // pred_check_branch
      %2753 = sbr.rel (%p2751) target = $region44
    $region43: #{forward.1} parent=5 // pred_region
      %s2754 = ssub.s32 %s8, 2
      // Predicated region
      $region45: #{forward.1} parent=43 // pred_check
        %p2755 = pneg %p100
      $region46: #{forward.1} parent=43 // pred_check_branch
        %2757 = sbr.rel (%p2755) target = $region48
      $region47: #{forward.1} parent=43 // pred_region
        %p2758 = scmp.lt.s32.totalorder %s19, 1
        %s2759 = scalar_select %p2758, %s19, 1
        %s2760 = smul.addr %s2759, 9
        %s2761 = smul.addr %s2760, 8
        %s2762 = scalar_lea.vmem %s2, %s2761
      $region48: #{forward.1} parent=43 // pred_fallthru
        _
    $region44: #{forward.1} parent=5 // pred_fallthru
      _
  $region6: #{forward.1} parent=0 // loop_footer
    %s12 = sadd.s32 1, %s8
  $region7: #{forward.1} parent=0 // loop_footer_branch
    %7 = sbr.rel target = $region3
  $region8: #{forward.1} parent=0 // loop_exit
    _

</llo_original>
